<compile_context>
chip_gen: v7x
topology: tpu7x:2x2x1
jax: 0.10.0
libtpu: 0.0.40
codegen_flags: <defaults>
</compile_context>

<pallas_src>
import functools

import numpy as np
import jax
import jax.numpy as jnp
from jax.experimental import pallas as pl
from jax.experimental.pallas import tpu as pltpu


def _tap_masks(H, W):
    """(9, H*W) float32 validity masks for the 3x3 taps (zero 'same' padding)."""
    p = np.arange(H * W)
    h, w = p // W, p % W
    rows = []
    for dh in (-1, 0, 1):
        for dw in (-1, 0, 1):
            valid = ((h + dh >= 0) & (h + dh < H) &
                     (w + dw >= 0) & (w + dw < W))
            rows.append(valid.astype(np.float32))
    return jnp.asarray(np.stack(rows))


def _im2col_into_slab(t, masks, slab_ref, *, W):
    """t: (C, L) f32 value; masks: (9, L) f32 value.

    Writes the 9 zero-padded 3x3 taps into slab_ref rows [0, 9*C) as bf16.
    Per-tap stores keep only ~1 tap live at a time (no big concat -> no vreg
    spills), and the bf16 slab is the MXU operand.
    """
    C, L = t.shape
    k = 0
    for dh in (-1, 0, 1):
        for dw in (-1, 0, 1):
            s = dh * W + dw                                    # flat lane shift
            shifted = t if s == 0 else pltpu.roll(t, shift=(-s) % L, axis=1)
            if dh == 0 and dw == 0:
                tap = shifted                                  # center tap always valid
            else:
                tap = shifted * masks[k:k + 1, :]              # zero the halo
            slab_ref[pl.ds(k * C, C), :] = tap.astype(slab_ref.dtype)
            k += 1


def _user_norm_kernel_batch_grid(seg_ref, x_ref, mask_ref, w1_ref, b1_ref,
                                 w2_ref, b2_ref, out_ref, slab_ref,
                                 *, W, norm_nc, eps):
    """One batch element per grid step (v7x: one per TensorCore)."""
    masks = mask_ref[...]                                      # (9, HW) f32
    Cin = seg_ref.shape[1]
    hidden = w1_ref.shape[0]

    # Shared 3x3 conv + ReLU: (hidden, 9*Cin)bf16 @ (9*Cin, HW)bf16 -> f32.
    seg = seg_ref[0].astype(jnp.float32)
    _im2col_into_slab(seg, masks, slab_ref, W=W)
    actv = jnp.dot(w1_ref[...], slab_ref[pl.ds(0, 9 * Cin), :],
                   preferred_element_type=jnp.float32)
    actv = jnp.maximum(actv + b1_ref[...], 0.0)

    # Fused gamma/beta 3x3 conv: (2*norm_nc, 9*hidden)bf16 @ (9*hidden, HW)bf16.
    _im2col_into_slab(actv, masks, slab_ref, W=W)
    gb = jnp.dot(w2_ref[...], slab_ref[pl.ds(0, 9 * hidden), :],
                 preferred_element_type=jnp.float32)
    gb = gb + b2_ref[...]
    gamma = jax.nn.sigmoid(gb[:norm_nc, :])
    beta = gb[norm_nc:, :]

    # InstanceNorm2d(affine=False, biased var, two-pass) + SPADE modulation.
    x = x_ref[0].astype(jnp.float32)
    mean = jnp.mean(x, axis=1, keepdims=True)
    var = jnp.mean((x - mean) ** 2, axis=1, keepdims=True)
    normalized = (x - mean) * jax.lax.rsqrt(var + eps)
    out_ref[0] = (normalized * (1.0 + gamma) + beta).astype(out_ref.dtype)


def _user_norm_kernel_batch_fold(seg_ref, x_ref, mask_ref, img_ref, w1_ref,
                                 b1_ref, w2_ref, b2_ref, out_ref, slab_ref,
                                 *, W, norm_nc, eps, n_images, HW):
    """Batch folded into lanes (single-TC chips): seg/x are (C, N*HW)."""
    masks = mask_ref[...]                                      # (9, N*HW) f32
    Cin = seg_ref.shape[0]
    hidden = w1_ref.shape[0]

    seg = seg_ref[...].astype(jnp.float32)
    _im2col_into_slab(seg, masks, slab_ref, W=W)
    actv = jnp.dot(w1_ref[...], slab_ref[pl.ds(0, 9 * Cin), :],
                   preferred_element_type=jnp.float32)
    actv = jnp.maximum(actv + b1_ref[...], 0.0)

    _im2col_into_slab(actv, masks, slab_ref, W=W)
    gb = jnp.dot(w2_ref[...], slab_ref[pl.ds(0, 9 * hidden), :],
                 preferred_element_type=jnp.float32)
    gb = gb + b2_ref[...]
    gamma = jax.nn.sigmoid(gb[:norm_nc, :])
    beta = gb[norm_nc:, :]

    # Per-image instance-norm stats via 0/1 lane selectors (images partition
    # the N*HW lane axis).  Two-pass form for numerical safety.
    x = x_ref[...].astype(jnp.float32)
    img = img_ref[...]                                         # (N, N*HW) f32
    inv_hw = 1.0 / float(HW)
    mean_full = jnp.zeros_like(x)
    rstd_full = jnp.zeros_like(x)
    for n in range(n_images):
        sel = img[n:n + 1, :]                                  # (1, N*HW)
        xs = x * sel
        mean_n = jnp.sum(xs, axis=1, keepdims=True) * inv_hw   # (C, 1)
        cen = xs - mean_n * sel
        var_n = jnp.sum(cen * cen, axis=1, keepdims=True) * inv_hw
        mean_full = mean_full + mean_n * sel
        rstd_full = rstd_full + jax.lax.rsqrt(var_n + eps) * sel
    normalized = (x - mean_full) * rstd_full
    out_ref[...] = (normalized * (1.0 + gamma) + beta).astype(out_ref.dtype)


def nearest_resize_nchw(x, H, W):
    """Matches F.interpolate(mode='nearest') for NCHW inputs (glue, outside kernel)."""
    n, c, h, w = x.shape
    rows = (jnp.arange(H) * h) // H
    cols = (jnp.arange(W) * w) // W
    return x[:, :, rows][:, :, :, cols]


def _is_v7x():
    try:
        kind = jax.devices()[0].device_kind
    except Exception:
        return False
    return "v7" in str(kind).lower()


def user_norm_forward(params, x, user_guide, noise, noise_in=True, eps=1e-5,
                      fold_batch=None):
    """x, user_guide, noise are NCHW (PyTorch convention)."""
    N, C, H, W = x.shape
    if noise_in:
        ug = nearest_resize_nchw(user_guide, H, W)
        un = nearest_resize_nchw(noise, H, W)
        seg = jnp.concatenate([un, ug], axis=1)   # torch.cat([user_noise, user_guide], 1)
    else:
        seg = user_guide
    Cin = seg.shape[1]
    hidden = params["w_shared"].shape[0]
    norm_nc = params["w_gamma"].shape[0]
    HW = H * W

    if fold_batch is None:
        # v5e/v6e have a single TensorCore: fold batch into lanes (wider MXU N,
        # no serial grid overhead).  v7x has 2 TCs: keep grid=(N,) "parallel".
        fold_batch = (not _is_v7x()) or N == 1

    # Repack conv weights: (Cout, Cin, 3, 3) -> (Cout, 9*Cin), tap-major columns
    # matching the kernel's im2col row order; gamma/beta fused along Cout.
    # bf16 for the MXU operands only; biases stay f32 (post-accumulate adds).
    def repack(w):
        cout, cin = w.shape[0], w.shape[1]
        return jnp.transpose(w, (0, 2, 3, 1)).reshape(cout, 9 * cin)

    w1 = repack(params["w_shared"]).astype(jnp.bfloat16)          # (hidden, 9*Cin)
    b1 = params["b_shared"].reshape(hidden, 1).astype(jnp.float32)
    w2 = jnp.concatenate([repack(params["w_gamma"]),
                          repack(params["w_beta"])], axis=0).astype(jnp.bfloat16)
    b2 = jnp.concatenate([params["b_gamma"],
                          params["b_beta"]]).reshape(2 * norm_nc, 1).astype(jnp.float32)

    slab_rows = 9 * max(Cin, hidden)
    masks = _tap_masks(H, W)                                      # (9, HW) f32

    if fold_batch:
        L = N * HW
        seg_f = jnp.transpose(seg.reshape(N, Cin, HW), (1, 0, 2)).reshape(Cin, L)
        x_f = jnp.transpose(x.reshape(N, C, HW), (1, 0, 2)).reshape(C, L)
        masks_f = jnp.tile(masks, (1, N))                         # (9, N*HW)
        img_np = np.zeros((N, L), np.float32)
        for n in range(N):
            img_np[n, n * HW:(n + 1) * HW] = 1.0
        img = jnp.asarray(img_np)                                 # per-image lane selector

        kernel = functools.partial(_user_norm_kernel_batch_fold, W=W,
                                   norm_nc=norm_nc, eps=eps, n_images=N, HW=HW)
        out_f = pl.pallas_call(
            kernel,
            out_shape=jax.ShapeDtypeStruct((C, L), x.dtype),
            grid_spec=pltpu.PrefetchScalarGridSpec(
                num_scalar_prefetch=0,
                grid=(1,),
                in_specs=[
                    pl.BlockSpec((Cin, L), lambda i: (0, 0)),
                    pl.BlockSpec((C, L), lambda i: (0, 0)),
                    pl.BlockSpec((9, L), lambda i: (0, 0)),
                    pl.BlockSpec((N, L), lambda i: (0, 0)),
                    pl.BlockSpec((hidden, 9 * Cin), lambda i: (0, 0)),
                    pl.BlockSpec((hidden, 1), lambda i: (0, 0)),
                    pl.BlockSpec((2 * norm_nc, 9 * hidden), lambda i: (0, 0)),
                    pl.BlockSpec((2 * norm_nc, 1), lambda i: (0, 0)),
                ],
                out_specs=pl.BlockSpec((C, L), lambda i: (0, 0)),
                scratch_shapes=[pltpu.VMEM((slab_rows, L), jnp.bfloat16)],
            ),
            compiler_params=pltpu.CompilerParams(
                dimension_semantics=("arbitrary",)),
        )(seg_f, x_f, masks_f, img, w1, b1, w2, b2)
        return jnp.transpose(out_f.reshape(C, N, HW), (1, 0, 2)).reshape(N, C, H, W)

    # v7x path: one batch element per grid step, both TensorCores busy.
    seg_flat = seg.reshape(N, Cin, HW)
    x_flat = x.reshape(N, C, HW)
    kernel = functools.partial(_user_norm_kernel_batch_grid, W=W,
                               norm_nc=norm_nc, eps=eps)
    out_flat = pl.pallas_call(
        kernel,
        out_shape=jax.ShapeDtypeStruct((N, C, HW), x.dtype),
        grid_spec=pltpu.PrefetchScalarGridSpec(
            num_scalar_prefetch=0,
            grid=(N,),
            in_specs=[
                pl.BlockSpec((1, Cin, HW), lambda n: (n, 0, 0)),
                pl.BlockSpec((1, C, HW), lambda n: (n, 0, 0)),
                pl.BlockSpec((9, HW), lambda n: (0, 0)),
                pl.BlockSpec((hidden, 9 * Cin), lambda n: (0, 0)),
                pl.BlockSpec((hidden, 1), lambda n: (0, 0)),
                pl.BlockSpec((2 * norm_nc, 9 * hidden), lambda n: (0, 0)),
                pl.BlockSpec((2 * norm_nc, 1), lambda n: (0, 0)),
            ],
            out_specs=pl.BlockSpec((1, C, HW), lambda n: (n, 0, 0)),
            scratch_shapes=[pltpu.VMEM((slab_rows, HW), jnp.bfloat16)],
        ),
        compiler_params=pltpu.CompilerParams(
            dimension_semantics=("parallel",)),
    )(seg_flat, x_flat, masks, w1, b1, w2, b2)
    return out_flat.reshape(N, C, H, W)


def init_params(key, label_nc, norm_nc, hidden, noise_in=True):
    cin_shared = label_nc * 2 if noise_in else label_nc
    ks = jax.random.split(key, 6)
    scale = 0.1
    return {
        "w_shared": scale * jax.random.normal(ks[0], (hidden, cin_shared, 3, 3), jnp.float32),
        "b_shared": scale * jax.random.normal(ks[1], (hidden,), jnp.float32),
        "w_gamma": scale * jax.random.normal(ks[2], (norm_nc, hidden, 3, 3), jnp.float32),
        "b_gamma": scale * jax.random.normal(ks[3], (norm_nc,), jnp.float32),
        "w_beta": scale * jax.random.normal(ks[4], (norm_nc, hidden, 3, 3), jnp.float32),
        "b_beta": scale * jax.random.normal(ks[5], (norm_nc,), jnp.float32),
    }


def _reference_forward(params, x, user_guide, noise, noise_in=True, eps=1e-5):
    """Pure-JAX reference mirroring the PyTorch module (for correctness check)."""
    if noise_in:
        H, W = x.shape[2], x.shape[3]
        ug = nearest_resize_nchw(user_guide, H, W)
        un = nearest_resize_nchw(noise, H, W)
        seg = jnp.concatenate([un, ug], axis=1)
    else:
        seg = user_guide

    def conv(z, w, b):
        o = jax.lax.conv_general_dilated(
            z, w, window_strides=(1, 1), padding=((1, 1), (1, 1)),
            dimension_numbers=("NCHW", "OIHW", "NCHW"),
            precision=jax.lax.Precision.HIGHEST)
        return o + b.reshape(1, -1, 1, 1)

    actv = jax.nn.relu(conv(seg, params["w_shared"], params["b_shared"]))
    gamma = jax.nn.sigmoid(conv(actv, params["w_gamma"], params["b_gamma"]))
    beta = conv(actv, params["w_beta"], params["b_beta"])

    mean = jnp.mean(x, axis=(2, 3), keepdims=True)
    var = jnp.mean((x - mean) ** 2, axis=(2, 3), keepdims=True)
    normalized = (x - mean) * jax.lax.rsqrt(var + eps)
    return normalized * (1.0 + gamma) + beta


if __name__ == "__main__":
    label_nc, norm_nc, hidden = 4, 4, 32
    N, H, W = 2, 16, 16
    gh, gw = 8, 8  # guide / noise spatial size before nearest upsample

    key = jax.random.PRNGKey(0)
    k_x, k_g, k_n, k_p = jax.random.split(key, 4)

    x = jax.random.normal(k_x, (N, norm_nc, H, W), jnp.float32)          # NCHW
    user_guide = jax.random.normal(k_g, (N, label_nc, gh, gw), jnp.float32)
    noise = jax.random.normal(k_n, (N, label_nc, gh, gw), jnp.float32)

    params = init_params(k_p, label_nc, norm_nc, hidden, noise_in=True)

    ref = jax.block_until_ready(
        _reference_forward(params, x, user_guide, noise, noise_in=True))

    # Exercise both layouts (batch folded into lanes for single-TC chips, and
    # the per-batch "parallel" grid used on v7x), regardless of which chip the
    # sandbox runs on.  The auto path (fold_batch=None) is one of these two.
    for fold in (True, False):
        out = user_norm_forward(params, x, user_guide, noise, noise_in=True,
                                fold_batch=fold)
        out = jax.block_until_ready(out)
        assert out.shape == (N, norm_nc, H, W)
        np.testing.assert_allclose(np.asarray(out), np.asarray(ref),
                                   rtol=1e-2, atol=1e-2)

    print("KERNEL_OK")
</pallas_src>

<mosaic_0001>
module attributes {stable_mosaic.version = 11 : i64} {
  func.func @_user_norm_kernel_batch_fold(%arg0: i32, %arg1: memref<8x512xf32, #tpu.memory_space<vmem>>, %arg2: memref<4x512xf32, #tpu.memory_space<vmem>>, %arg3: memref<9x512xf32, #tpu.memory_space<vmem>>, %arg4: memref<2x512xf32, #tpu.memory_space<vmem>>, %arg5: memref<32x72xbf16, #tpu.memory_space<vmem>>, %arg6: memref<32x1xf32, #tpu.memory_space<vmem>>, %arg7: memref<8x288xbf16, #tpu.memory_space<vmem>>, %arg8: memref<8x1xf32, #tpu.memory_space<vmem>>, %arg9: memref<4x512xf32, #tpu.memory_space<vmem>>, %arg10: memref<288x512xbf16, #tpu.memory_space<vmem>>) attributes {dimension_semantics = [#tpu.dimension_semantics<arbitrary>], iteration_bounds = array<i64: 1>, scalar_prefetch = 0 : i64, scratch_operands = 1 : i64, tpu.core_type = #tpu.core_type<tc>, window_params = [{pipeline_mode = #tpu.pipeline_mode<synchronous>, transform_indices = @transform_0, window_bounds = array<i64: 8, 512>}, {pipeline_mode = #tpu.pipeline_mode<synchronous>, transform_indices = @transform_1, window_bounds = array<i64: 4, 512>}, {pipeline_mode = #tpu.pipeline_mode<synchronous>, transform_indices = @transform_2, window_bounds = array<i64: 9, 512>}, {pipeline_mode = #tpu.pipeline_mode<synchronous>, transform_indices = @transform_3, window_bounds = array<i64: 2, 512>}, {pipeline_mode = #tpu.pipeline_mode<synchronous>, transform_indices = @transform_4, window_bounds = array<i64: 32, 72>}, {pipeline_mode = #tpu.pipeline_mode<synchronous>, transform_indices = @transform_5, window_bounds = array<i64: 32, 1>}, {pipeline_mode = #tpu.pipeline_mode<synchronous>, transform_indices = @transform_6, window_bounds = array<i64: 8, 288>}, {pipeline_mode = #tpu.pipeline_mode<synchronous>, transform_indices = @transform_7, window_bounds = array<i64: 8, 1>}, {pipeline_mode = #tpu.pipeline_mode<synchronous>, transform_indices = @transform_8, window_bounds = array<i64: 4, 512>}]} {
    %c0 = arith.constant 0 : index
    %c0_0 = arith.constant 0 : index
    %0 = vector.load %arg3[%c0, %c0_0] : memref<9x512xf32, #tpu.memory_space<vmem>>, vector<9x512xf32>
    %c0_1 = arith.constant 0 : index
    %c0_2 = arith.constant 0 : index
    %1 = vector.load %arg1[%c0_1, %c0_2] : memref<8x512xf32, #tpu.memory_space<vmem>>, vector<8x512xf32>
    %c17_i32 = arith.constant 17 : i32
    %2 = tpu.dynamic_rotate %1 by %c17_i32 dim 1 : vector<8x512xf32>, i32 -> vector<8x512xf32>
    %3 = vector.extract_strided_slice %0 {offsets = [0, 0], sizes = [1, 512], strides = [1, 1]} : vector<9x512xf32> to vector<1x512xf32>
    %4 = vector.broadcast %3 : vector<1x512xf32> to vector<8x512xf32>
    %5 = arith.mulf %2, %4 : vector<8x512xf32>
    %6 = arith.truncf %5 : vector<8x512xf32> to vector<8x512xbf16>
    %c0_3 = arith.constant 0 : index
    %c0_4 = arith.constant 0 : index
    %7 = vector.load %arg10[%c0_3, %c0_4] : memref<288x512xbf16, #tpu.memory_space<vmem>>, vector<8x512xbf16>
    tpu.vector_store %arg10[%c0_3, %c0_4], %6 {strides = array<i32>} : memref<288x512xbf16, #tpu.memory_space<vmem>>, vector<8x512xbf16>,
    %c16_i32 = arith.constant 16 : i32
    %8 = tpu.dynamic_rotate %1 by %c16_i32 dim 1 : vector<8x512xf32>, i32 -> vector<8x512xf32>
    %9 = vector.extract_strided_slice %0 {offsets = [1, 0], sizes = [1, 512], strides = [1, 1]} : vector<9x512xf32> to vector<1x512xf32>
    %10 = vector.broadcast %9 : vector<1x512xf32> to vector<8x512xf32>
    %11 = arith.mulf %8, %10 : vector<8x512xf32>
    %12 = arith.truncf %11 : vector<8x512xf32> to vector<8x512xbf16>
    %c8 = arith.constant 8 : index
    %c0_5 = arith.constant 0 : index
    %13 = vector.load %arg10[%c8, %c0_5] : memref<288x512xbf16, #tpu.memory_space<vmem>>, vector<8x512xbf16>
    tpu.vector_store %arg10[%c8, %c0_5], %12 {strides = array<i32>} : memref<288x512xbf16, #tpu.memory_space<vmem>>, vector<8x512xbf16>,
    %c15_i32 = arith.constant 15 : i32
    %14 = tpu.dynamic_rotate %1 by %c15_i32 dim 1 : vector<8x512xf32>, i32 -> vector<8x512xf32>
    %15 = vector.extract_strided_slice %0 {offsets = [2, 0], sizes = [1, 512], strides = [1, 1]} : vector<9x512xf32> to vector<1x512xf32>
    %16 = vector.broadcast %15 : vector<1x512xf32> to vector<8x512xf32>
    %17 = arith.mulf %14, %16 : vector<8x512xf32>
    %18 = arith.truncf %17 : vector<8x512xf32> to vector<8x512xbf16>
    %c16 = arith.constant 16 : index
    %c0_6 = arith.constant 0 : index
    %19 = vector.load %arg10[%c16, %c0_6] : memref<288x512xbf16, #tpu.memory_space<vmem>>, vector<8x512xbf16>
    tpu.vector_store %arg10[%c16, %c0_6], %18 {strides = array<i32>} : memref<288x512xbf16, #tpu.memory_space<vmem>>, vector<8x512xbf16>,
    %c1_i32 = arith.constant 1 : i32
    %20 = tpu.dynamic_rotate %1 by %c1_i32 dim 1 : vector<8x512xf32>, i32 -> vector<8x512xf32>
    %21 = vector.extract_strided_slice %0 {offsets = [3, 0], sizes = [1, 512], strides = [1, 1]} : vector<9x512xf32> to vector<1x512xf32>
    %22 = vector.broadcast %21 : vector<1x512xf32> to vector<8x512xf32>
    %23 = arith.mulf %20, %22 : vector<8x512xf32>
    %24 = arith.truncf %23 : vector<8x512xf32> to vector<8x512xbf16>
    %c24 = arith.constant 24 : index
    %c0_7 = arith.constant 0 : index
    %25 = vector.load %arg10[%c24, %c0_7] : memref<288x512xbf16, #tpu.memory_space<vmem>>, vector<8x512xbf16>
    tpu.vector_store %arg10[%c24, %c0_7], %24 {strides = array<i32>} : memref<288x512xbf16, #tpu.memory_space<vmem>>, vector<8x512xbf16>,
    %26 = arith.truncf %1 : vector<8x512xf32> to vector<8x512xbf16>
    %c32 = arith.constant 32 : index
    %c0_8 = arith.constant 0 : index
    %27 = vector.load %arg10[%c32, %c0_8] : memref<288x512xbf16, #tpu.memory_space<vmem>>, vector<8x512xbf16>
    tpu.vector_store %arg10[%c32, %c0_8], %26 {strides = array<i32>} : memref<288x512xbf16, #tpu.memory_space<vmem>>, vector<8x512xbf16>,
    %c511_i32 = arith.constant 511 : i32
    %28 = tpu.dynamic_rotate %1 by %c511_i32 dim 1 : vector<8x512xf32>, i32 -> vector<8x512xf32>
    %29 = vector.extract_strided_slice %0 {offsets = [5, 0], sizes = [1, 512], strides = [1, 1]} : vector<9x512xf32> to vector<1x512xf32>
    %30 = vector.broadcast %29 : vector<1x512xf32> to vector<8x512xf32>
    %31 = arith.mulf %28, %30 : vector<8x512xf32>
    %32 = arith.truncf %31 : vector<8x512xf32> to vector<8x512xbf16>
    %c40 = arith.constant 40 : index
    %c0_9 = arith.constant 0 : index
    %33 = vector.load %arg10[%c40, %c0_9] : memref<288x512xbf16, #tpu.memory_space<vmem>>, vector<8x512xbf16>
    tpu.vector_store %arg10[%c40, %c0_9], %32 {strides = array<i32>} : memref<288x512xbf16, #tpu.memory_space<vmem>>, vector<8x512xbf16>,
    %c497_i32 = arith.constant 497 : i32
    %34 = tpu.dynamic_rotate %1 by %c497_i32 dim 1 : vector<8x512xf32>, i32 -> vector<8x512xf32>
    %35 = vector.extract_strided_slice %0 {offsets = [6, 0], sizes = [1, 512], strides = [1, 1]} : vector<9x512xf32> to vector<1x512xf32>
    %36 = vector.broadcast %35 : vector<1x512xf32> to vector<8x512xf32>
    %37 = arith.mulf %34, %36 : vector<8x512xf32>
    %38 = arith.truncf %37 : vector<8x512xf32> to vector<8x512xbf16>
    %c48 = arith.constant 48 : index
    %c0_10 = arith.constant 0 : index
    %39 = vector.load %arg10[%c48, %c0_10] : memref<288x512xbf16, #tpu.memory_space<vmem>>, vector<8x512xbf16>
    tpu.vector_store %arg10[%c48, %c0_10], %38 {strides = array<i32>} : memref<288x512xbf16, #tpu.memory_space<vmem>>, vector<8x512xbf16>,
    %c496_i32 = arith.constant 496 : i32
    %40 = tpu.dynamic_rotate %1 by %c496_i32 dim 1 : vector<8x512xf32>, i32 -> vector<8x512xf32>
    %41 = vector.extract_strided_slice %0 {offsets = [7, 0], sizes = [1, 512], strides = [1, 1]} : vector<9x512xf32> to vector<1x512xf32>
    %42 = vector.broadcast %41 : vector<1x512xf32> to vector<8x512xf32>
    %43 = arith.mulf %40, %42 : vector<8x512xf32>
    %44 = arith.truncf %43 : vector<8x512xf32> to vector<8x512xbf16>
    %c56 = arith.constant 56 : index
    %c0_11 = arith.constant 0 : index
    %45 = vector.load %arg10[%c56, %c0_11] : memref<288x512xbf16, #tpu.memory_space<vmem>>, vector<8x512xbf16>
    tpu.vector_store %arg10[%c56, %c0_11], %44 {strides = array<i32>} : memref<288x512xbf16, #tpu.memory_space<vmem>>, vector<8x512xbf16>,
    %c495_i32 = arith.constant 495 : i32
    %46 = tpu.dynamic_rotate %1 by %c495_i32 dim 1 : vector<8x512xf32>, i32 -> vector<8x512xf32>
    %47 = vector.extract_strided_slice %0 {offsets = [8, 0], sizes = [1, 512], strides = [1, 1]} : vector<9x512xf32> to vector<1x512xf32>
    %48 = vector.broadcast %47 : vector<1x512xf32> to vector<8x512xf32>
    %49 = arith.mulf %46, %48 : vector<8x512xf32>
    %50 = arith.truncf %49 : vector<8x512xf32> to vector<8x512xbf16>
    %c64 = arith.constant 64 : index
    %c0_12 = arith.constant 0 : index
    %51 = vector.load %arg10[%c64, %c0_12] : memref<288x512xbf16, #tpu.memory_space<vmem>>, vector<8x512xbf16>
    tpu.vector_store %arg10[%c64, %c0_12], %50 {strides = array<i32>} : memref<288x512xbf16, #tpu.memory_space<vmem>>, vector<8x512xbf16>,
    %c0_13 = arith.constant 0 : index
    %c0_14 = arith.constant 0 : index
    %52 = vector.load %arg5[%c0_13, %c0_14] : memref<32x72xbf16, #tpu.memory_space<vmem>>, vector<32x72xbf16>
    %c0_15 = arith.constant 0 : index
    %c0_16 = arith.constant 0 : index
    %53 = vector.load %arg10[%c0_15, %c0_16] : memref<288x512xbf16, #tpu.memory_space<vmem>>, vector<72x512xbf16>
    %cst = arith.constant dense<0.000000e+00> : vector<32x512xf32>
    %54 = tpu.matmul %52, %53, %cst {dimension_numbers = #tpu.dot_dimension_numbers<[1], [0], [0], [1], [0, 0, 1, 1], [], []>} : vector<32x72xbf16>, vector<72x512xbf16>, vector<32x512xf32> -> vector<32x512xf32>
    %c0_17 = arith.constant 0 : index
    %c0_18 = arith.constant 0 : index
    %55 = vector.load %arg6[%c0_17, %c0_18] : memref<32x1xf32, #tpu.memory_space<vmem>>, vector<32x1xf32>
    %56 = vector.broadcast %55 : vector<32x1xf32> to vector<32x512xf32>
    %57 = arith.addf %54, %56 : vector<32x512xf32>
    %cst_19 = arith.constant 0.000000e+00 : f32
    %58 = vector.broadcast %cst_19 : f32 to vector<32x512xf32>
    %59 = arith.maximumf %57, %58 : vector<32x512xf32>
    %c17_i32_20 = arith.constant 17 : i32
    %60 = tpu.dynamic_rotate %59 by %c17_i32_20 dim 1 : vector<32x512xf32>, i32 -> vector<32x512xf32>
    %61 = vector.extract_strided_slice %0 {offsets = [0, 0], sizes = [1, 512], strides = [1, 1]} : vector<9x512xf32> to vector<1x512xf32>
    %62 = vector.broadcast %61 : vector<1x512xf32> to vector<32x512xf32>
    %63 = arith.mulf %60, %62 : vector<32x512xf32>
    %64 = arith.truncf %63 : vector<32x512xf32> to vector<32x512xbf16>
    %c0_21 = arith.constant 0 : index
    %c0_22 = arith.constant 0 : index
    %65 = vector.load %arg10[%c0_21, %c0_22] : memref<288x512xbf16, #tpu.memory_space<vmem>>, vector<32x512xbf16>
    tpu.vector_store %arg10[%c0_21, %c0_22], %64 {strides = array<i32>} : memref<288x512xbf16, #tpu.memory_space<vmem>>, vector<32x512xbf16>,
    %c16_i32_23 = arith.constant 16 : i32
    %66 = tpu.dynamic_rotate %59 by %c16_i32_23 dim 1 : vector<32x512xf32>, i32 -> vector<32x512xf32>
    %67 = vector.extract_strided_slice %0 {offsets = [1, 0], sizes = [1, 512], strides = [1, 1]} : vector<9x512xf32> to vector<1x512xf32>
    %68 = vector.broadcast %67 : vector<1x512xf32> to vector<32x512xf32>
    %69 = arith.mulf %66, %68 : vector<32x512xf32>
    %70 = arith.truncf %69 : vector<32x512xf32> to vector<32x512xbf16>
    %c32_24 = arith.constant 32 : index
    %c0_25 = arith.constant 0 : index
    %71 = vector.load %arg10[%c32_24, %c0_25] : memref<288x512xbf16, #tpu.memory_space<vmem>>, vector<32x512xbf16>
    tpu.vector_store %arg10[%c32_24, %c0_25], %70 {strides = array<i32>} : memref<288x512xbf16, #tpu.memory_space<vmem>>, vector<32x512xbf16>,
    %c15_i32_26 = arith.constant 15 : i32
    %72 = tpu.dynamic_rotate %59 by %c15_i32_26 dim 1 : vector<32x512xf32>, i32 -> vector<32x512xf32>
    %73 = vector.extract_strided_slice %0 {offsets = [2, 0], sizes = [1, 512], strides = [1, 1]} : vector<9x512xf32> to vector<1x512xf32>
    %74 = vector.broadcast %73 : vector<1x512xf32> to vector<32x512xf32>
    %75 = arith.mulf %72, %74 : vector<32x512xf32>
    %76 = arith.truncf %75 : vector<32x512xf32> to vector<32x512xbf16>
    %c64_27 = arith.constant 64 : index
    %c0_28 = arith.constant 0 : index
    %77 = vector.load %arg10[%c64_27, %c0_28] : memref<288x512xbf16, #tpu.memory_space<vmem>>, vector<32x512xbf16>
    tpu.vector_store %arg10[%c64_27, %c0_28], %76 {strides = array<i32>} : memref<288x512xbf16, #tpu.memory_space<vmem>>, vector<32x512xbf16>,
    %c1_i32_29 = arith.constant 1 : i32
    %78 = tpu.dynamic_rotate %59 by %c1_i32_29 dim 1 : vector<32x512xf32>, i32 -> vector<32x512xf32>
    %79 = vector.extract_strided_slice %0 {offsets = [3, 0], sizes = [1, 512], strides = [1, 1]} : vector<9x512xf32> to vector<1x512xf32>
    %80 = vector.broadcast %79 : vector<1x512xf32> to vector<32x512xf32>
    %81 = arith.mulf %78, %80 : vector<32x512xf32>
    %82 = arith.truncf %81 : vector<32x512xf32> to vector<32x512xbf16>
    %c96 = arith.constant 96 : index
    %c0_30 = arith.constant 0 : index
    %83 = vector.load %arg10[%c96, %c0_30] : memref<288x512xbf16, #tpu.memory_space<vmem>>, vector<32x512xbf16>
    tpu.vector_store %arg10[%c96, %c0_30], %82 {strides = array<i32>} : memref<288x512xbf16, #tpu.memory_space<vmem>>, vector<32x512xbf16>,
    %84 = arith.truncf %59 : vector<32x512xf32> to vector<32x512xbf16>
    %c128 = arith.constant 128 : index
    %c0_31 = arith.constant 0 : index
    %85 = vector.load %arg10[%c128, %c0_31] : memref<288x512xbf16, #tpu.memory_space<vmem>>, vector<32x512xbf16>
    tpu.vector_store %arg10[%c128, %c0_31], %84 {strides = array<i32>} : memref<288x512xbf16, #tpu.memory_space<vmem>>, vector<32x512xbf16>,
    %c511_i32_32 = arith.constant 511 : i32
    %86 = tpu.dynamic_rotate %59 by %c511_i32_32 dim 1 : vector<32x512xf32>, i32 -> vector<32x512xf32>
    %87 = vector.extract_strided_slice %0 {offsets = [5, 0], sizes = [1, 512], strides = [1, 1]} : vector<9x512xf32> to vector<1x512xf32>
    %88 = vector.broadcast %87 : vector<1x512xf32> to vector<32x512xf32>
    %89 = arith.mulf %86, %88 : vector<32x512xf32>
    %90 = arith.truncf %89 : vector<32x512xf32> to vector<32x512xbf16>
    %c160 = arith.constant 160 : index
    %c0_33 = arith.constant 0 : index
    %91 = vector.load %arg10[%c160, %c0_33] : memref<288x512xbf16, #tpu.memory_space<vmem>>, vector<32x512xbf16>
    tpu.vector_store %arg10[%c160, %c0_33], %90 {strides = array<i32>} : memref<288x512xbf16, #tpu.memory_space<vmem>>, vector<32x512xbf16>,
    %c497_i32_34 = arith.constant 497 : i32
    %92 = tpu.dynamic_rotate %59 by %c497_i32_34 dim 1 : vector<32x512xf32>, i32 -> vector<32x512xf32>
    %93 = vector.extract_strided_slice %0 {offsets = [6, 0], sizes = [1, 512], strides = [1, 1]} : vector<9x512xf32> to vector<1x512xf32>
    %94 = vector.broadcast %93 : vector<1x512xf32> to vector<32x512xf32>
    %95 = arith.mulf %92, %94 : vector<32x512xf32>
    %96 = arith.truncf %95 : vector<32x512xf32> to vector<32x512xbf16>
    %c192 = arith.constant 192 : index
    %c0_35 = arith.constant 0 : index
    %97 = vector.load %arg10[%c192, %c0_35] : memref<288x512xbf16, #tpu.memory_space<vmem>>, vector<32x512xbf16>
    tpu.vector_store %arg10[%c192, %c0_35], %96 {strides = array<i32>} : memref<288x512xbf16, #tpu.memory_space<vmem>>, vector<32x512xbf16>,
    %c496_i32_36 = arith.constant 496 : i32
    %98 = tpu.dynamic_rotate %59 by %c496_i32_36 dim 1 : vector<32x512xf32>, i32 -> vector<32x512xf32>
    %99 = vector.extract_strided_slice %0 {offsets = [7, 0], sizes = [1, 512], strides = [1, 1]} : vector<9x512xf32> to vector<1x512xf32>
    %100 = vector.broadcast %99 : vector<1x512xf32> to vector<32x512xf32>
    %101 = arith.mulf %98, %100 : vector<32x512xf32>
    %102 = arith.truncf %101 : vector<32x512xf32> to vector<32x512xbf16>
    %c224 = arith.constant 224 : index
    %c0_37 = arith.constant 0 : index
    %103 = vector.load %arg10[%c224, %c0_37] : memref<288x512xbf16, #tpu.memory_space<vmem>>, vector<32x512xbf16>
    tpu.vector_store %arg10[%c224, %c0_37], %102 {strides = array<i32>} : memref<288x512xbf16, #tpu.memory_space<vmem>>, vector<32x512xbf16>,
    %c495_i32_38 = arith.constant 495 : i32
    %104 = tpu.dynamic_rotate %59 by %c495_i32_38 dim 1 : vector<32x512xf32>, i32 -> vector<32x512xf32>
    %105 = vector.extract_strided_slice %0 {offsets = [8, 0], sizes = [1, 512], strides = [1, 1]} : vector<9x512xf32> to vector<1x512xf32>
    %106 = vector.broadcast %105 : vector<1x512xf32> to vector<32x512xf32>
    %107 = arith.mulf %104, %106 : vector<32x512xf32>
    %108 = arith.truncf %107 : vector<32x512xf32> to vector<32x512xbf16>
    %c256 = arith.constant 256 : index
    %c0_39 = arith.constant 0 : index
    %109 = vector.load %arg10[%c256, %c0_39] : memref<288x512xbf16, #tpu.memory_space<vmem>>, vector<32x512xbf16>
    tpu.vector_store %arg10[%c256, %c0_39], %108 {strides = array<i32>} : memref<288x512xbf16, #tpu.memory_space<vmem>>, vector<32x512xbf16>,
    %c0_40 = arith.constant 0 : index
    %c0_41 = arith.constant 0 : index
    %110 = vector.load %arg7[%c0_40, %c0_41] : memref<8x288xbf16, #tpu.memory_space<vmem>>, vector<8x288xbf16>
    %c0_42 = arith.constant 0 : index
    %c0_43 = arith.constant 0 : index
    %111 = vector.load %arg10[%c0_42, %c0_43] : memref<288x512xbf16, #tpu.memory_space<vmem>>, vector<288x512xbf16>
    %cst_44 = arith.constant dense<0.000000e+00> : vector<8x512xf32>
    %112 = tpu.matmul %110, %111, %cst_44 {dimension_numbers = #tpu.dot_dimension_numbers<[1], [0], [0], [1], [0, 0, 1, 1], [], []>} : vector<8x288xbf16>, vector<288x512xbf16>, vector<8x512xf32> -> vector<8x512xf32>
    %c0_45 = arith.constant 0 : index
    %c0_46 = arith.constant 0 : index
    %113 = vector.load %arg8[%c0_45, %c0_46] : memref<8x1xf32, #tpu.memory_space<vmem>>, vector<8x1xf32>
    %114 = vector.broadcast %113 : vector<8x1xf32> to vector<8x512xf32>
    %115 = arith.addf %112, %114 : vector<8x512xf32>
    %116 = vector.extract_strided_slice %115 {offsets = [0, 0], sizes = [4, 512], strides = [1, 1]} : vector<8x512xf32> to vector<4x512xf32>
    %117 = arith.negf %116 : vector<4x512xf32>
    %118 = math.exp %117 : vector<4x512xf32>
    %cst_47 = arith.constant 1.000000e+00 : f32
    %119 = vector.broadcast %cst_47 : f32 to vector<4x512xf32>
    %120 = arith.addf %119, %118 : vector<4x512xf32>
    %121 = arith.divf %119, %120 : vector<4x512xf32>
    %122 = vector.extract_strided_slice %115 {offsets = [4, 0], sizes = [4, 512], strides = [1, 1]} : vector<8x512xf32> to vector<4x512xf32>
    %c0_48 = arith.constant 0 : index
    %c0_49 = arith.constant 0 : index
    %123 = vector.load %arg2[%c0_48, %c0_49] : memref<4x512xf32, #tpu.memory_space<vmem>>, vector<4x512xf32>
    %c0_50 = arith.constant 0 : index
    %c0_51 = arith.constant 0 : index
    %124 = vector.load %arg4[%c0_50, %c0_51] : memref<2x512xf32, #tpu.memory_space<vmem>>, vector<2x512xf32>
    %cst_52 = arith.constant 0.000000e+00 : f32
    %125 = vector.broadcast %cst_52 : f32 to vector<4x512xf32>
    %cst_53 = arith.constant 0.000000e+00 : f32
    %126 = vector.broadcast %cst_53 : f32 to vector<4x512xf32>
    %127 = vector.extract_strided_slice %124 {offsets = [0, 0], sizes = [1, 512], strides = [1, 1]} : vector<2x512xf32> to vector<1x512xf32>
    %128 = vector.broadcast %127 : vector<1x512xf32> to vector<4x512xf32>
    %129 = arith.mulf %123, %128 : vector<4x512xf32>
    %cst_54 = arith.constant dense<0.000000e+00> : vector<4xf32>
    %130 = vector.multi_reduction <add>, %129, %cst_54 [1] : vector<4x512xf32> to vector<4xf32>
    %131 = vector.shape_cast %130 : vector<4xf32> to vector<4x1xf32>
    %cst_55 = arith.constant 3.906250e-03 : f32
    %132 = vector.broadcast %cst_55 : f32 to vector<4x1xf32>
    %133 = arith.mulf %131, %132 : vector<4x1xf32>
    %134 = vector.broadcast %133 : vector<4x1xf32> to vector<4x512xf32>
    %135 = vector.broadcast %127 : vector<1x512xf32> to vector<4x512xf32>
    %136 = arith.mulf %134, %135 : vector<4x512xf32>
    %137 = arith.subf %129, %136 : vector<4x512xf32>
    %138 = arith.mulf %137, %137 : vector<4x512xf32>
    %cst_56 = arith.constant dense<0.000000e+00> : vector<4xf32>
    %139 = vector.multi_reduction <add>, %138, %cst_56 [1] : vector<4x512xf32> to vector<4xf32>
    %140 = vector.shape_cast %139 : vector<4xf32> to vector<4x1xf32>
    %cst_57 = arith.constant 3.906250e-03 : f32
    %141 = vector.broadcast %cst_57 : f32 to vector<4x1xf32>
    %142 = arith.mulf %140, %141 : vector<4x1xf32>
    %143 = vector.broadcast %133 : vector<4x1xf32> to vector<4x512xf32>
    %144 = vector.broadcast %127 : vector<1x512xf32> to vector<4x512xf32>
    %145 = arith.mulf %143, %144 : vector<4x512xf32>
    %146 = arith.addf %125, %145 : vector<4x512xf32>
    %cst_58 = arith.constant 9.99999974E-6 : f32
    %147 = vector.broadcast %cst_58 : f32 to vector<4x1xf32>
    %148 = arith.addf %142, %147 : vector<4x1xf32>
    %149 = math.rsqrt %148 : vector<4x1xf32>
    %150 = vector.broadcast %149 : vector<4x1xf32> to vector<4x512xf32>
    %151 = vector.broadcast %127 : vector<1x512xf32> to vector<4x512xf32>
    %152 = arith.mulf %150, %151 : vector<4x512xf32>
    %153 = arith.addf %126, %152 : vector<4x512xf32>
    %154 = vector.extract_strided_slice %124 {offsets = [1, 0], sizes = [1, 512], strides = [1, 1]} : vector<2x512xf32> to vector<1x512xf32>
    %155 = vector.broadcast %154 : vector<1x512xf32> to vector<4x512xf32>
    %156 = arith.mulf %123, %155 : vector<4x512xf32>
    %cst_59 = arith.constant dense<0.000000e+00> : vector<4xf32>
    %157 = vector.multi_reduction <add>, %156, %cst_59 [1] : vector<4x512xf32> to vector<4xf32>
    %158 = vector.shape_cast %157 : vector<4xf32> to vector<4x1xf32>
    %cst_60 = arith.constant 3.906250e-03 : f32
    %159 = vector.broadcast %cst_60 : f32 to vector<4x1xf32>
    %160 = arith.mulf %158, %159 : vector<4x1xf32>
    %161 = vector.broadcast %160 : vector<4x1xf32> to vector<4x512xf32>
    %162 = vector.broadcast %154 : vector<1x512xf32> to vector<4x512xf32>
    %163 = arith.mulf %161, %162 : vector<4x512xf32>
    %164 = arith.subf %156, %163 : vector<4x512xf32>
    %165 = arith.mulf %164, %164 : vector<4x512xf32>
    %cst_61 = arith.constant dense<0.000000e+00> : vector<4xf32>
    %166 = vector.multi_reduction <add>, %165, %cst_61 [1] : vector<4x512xf32> to vector<4xf32>
    %167 = vector.shape_cast %166 : vector<4xf32> to vector<4x1xf32>
    %cst_62 = arith.constant 3.906250e-03 : f32
    %168 = vector.broadcast %cst_62 : f32 to vector<4x1xf32>
    %169 = arith.mulf %167, %168 : vector<4x1xf32>
    %170 = vector.broadcast %160 : vector<4x1xf32> to vector<4x512xf32>
    %171 = vector.broadcast %154 : vector<1x512xf32> to vector<4x512xf32>
    %172 = arith.mulf %170, %171 : vector<4x512xf32>
    %173 = arith.addf %146, %172 : vector<4x512xf32>
    %cst_63 = arith.constant 9.99999974E-6 : f32
    %174 = vector.broadcast %cst_63 : f32 to vector<4x1xf32>
    %175 = arith.addf %169, %174 : vector<4x1xf32>
    %176 = math.rsqrt %175 : vector<4x1xf32>
    %177 = vector.broadcast %176 : vector<4x1xf32> to vector<4x512xf32>
    %178 = vector.broadcast %154 : vector<1x512xf32> to vector<4x512xf32>
    %179 = arith.mulf %177, %178 : vector<4x512xf32>
    %180 = arith.addf %153, %179 : vector<4x512xf32>
    %181 = arith.subf %123, %173 : vector<4x512xf32>
    %182 = arith.mulf %181, %180 : vector<4x512xf32>
    %cst_64 = arith.constant 1.000000e+00 : f32
    %183 = vector.broadcast %cst_64 : f32 to vector<4x512xf32>
    %184 = arith.addf %183, %121 : vector<4x512xf32>
    %185 = arith.mulf %182, %184 : vector<4x512xf32>
    %186 = arith.addf %185, %122 : vector<4x512xf32>
    %c0_65 = arith.constant 0 : index
    %c0_66 = arith.constant 0 : index
    %187 = vector.load %arg9[%c0_65, %c0_66] : memref<4x512xf32, #tpu.memory_space<vmem>>, vector<4x512xf32>
    tpu.vector_store %arg9[%c0_65, %c0_66], %186 {strides = array<i32>} : memref<4x512xf32, #tpu.memory_space<vmem>>, vector<4x512xf32>,
    return
  }
  func.func @transform_0(%arg0: i32) -> (i32, i32) {
    %c0_i32 = arith.constant 0 : i32
    %c0_i32_0 = arith.constant 0 : i32
    %c0_i32_1 = arith.constant 0 : i32
    return %c0_i32, %c0_i32_0 : i32, i32
  }
  func.func @transform_1(%arg0: i32) -> (i32, i32) {
    %c0_i32 = arith.constant 0 : i32
    %c0_i32_0 = arith.constant 0 : i32
    %c0_i32_1 = arith.constant 0 : i32
    return %c0_i32, %c0_i32_0 : i32, i32
  }
  func.func @transform_2(%arg0: i32) -> (i32, i32) {
    %c0_i32 = arith.constant 0 : i32
    %c0_i32_0 = arith.constant 0 : i32
    %c0_i32_1 = arith.constant 0 : i32
    return %c0_i32, %c0_i32_0 : i32, i32
  }
  func.func @transform_3(%arg0: i32) -> (i32, i32) {
    %c0_i32 = arith.constant 0 : i32
    %c0_i32_0 = arith.constant 0 : i32
    %c0_i32_1 = arith.constant 0 : i32
    return %c0_i32, %c0_i32_0 : i32, i32
  }
  func.func @transform_4(%arg0: i32) -> (i32, i32) {
    %c0_i32 = arith.constant 0 : i32
    %c0_i32_0 = arith.constant 0 : i32
    %c0_i32_1 = arith.constant 0 : i32
    return %c0_i32, %c0_i32_0 : i32, i32
  }
  func.func @transform_5(%arg0: i32) -> (i32, i32) {
    %c0_i32 = arith.constant 0 : i32
    %c0_i32_0 = arith.constant 0 : i32
    %c0_i32_1 = arith.constant 0 : i32
    return %c0_i32, %c0_i32_0 : i32, i32
  }
  func.func @transform_6(%arg0: i32) -> (i32, i32) {
    %c0_i32 = arith.constant 0 : i32
    %c0_i32_0 = arith.constant 0 : i32
    %c0_i32_1 = arith.constant 0 : i32
    return %c0_i32, %c0_i32_0 : i32, i32
  }
  func.func @transform_7(%arg0: i32) -> (i32, i32) {
    %c0_i32 = arith.constant 0 : i32
    %c0_i32_0 = arith.constant 0 : i32
    %c0_i32_1 = arith.constant 0 : i32
    return %c0_i32, %c0_i32_0 : i32, i32
  }
  func.func @transform_8(%arg0: i32) -> (i32, i32) {
    %c0_i32 = arith.constant 0 : i32
    %c0_i32_0 = arith.constant 0 : i32
    %c0_i32_1 = arith.constant 0 : i32
    return %c0_i32, %c0_i32_0 : i32, i32
  }
}

</mosaic_0001>

<llo_original>
// kernel: tpu_custom_call.1
$region0: #{tpu_custom_call.1}
  #allocation0 [shape = 'u32[]', space=smem, size = 0x4, offset = 0x4, fixed_abs, tag = 'smem constant byte address 0x4 - core index']
  #allocation1 [shape = 'u32[144,128]{1,0:T(1,128)}', space=vmem, size = 0x12000, scoped, tag = 'internal scratch']
  #allocation2 [shape = 'bf16[288,512]{1,0:T(16,128)(2,1)}', space=vmem, size = 0x48000, scoped, tag = 'scratch operand']
  %s0 = inlined_call_operand.vmem [shape: f32[8,512], index: 0, kind: input, shape index: {}]
  %s1 = inlined_call_operand.hbm [shape: f32[4,512], index: 1, kind: input, shape index: {}]
  %s2 = inlined_call_operand.hbm [shape: f32[9,512], index: 2, kind: input, shape index: {}]
  %s3 = inlined_call_operand.hbm [shape: f32[2,512], index: 3, kind: input, shape index: {}]
  %s4 = inlined_call_operand.vmem [shape: bf16[32,72], index: 4, kind: input, shape index: {}]
  %s5 = inlined_call_operand.vmem [shape: f32[32,1], index: 5, kind: input, shape index: {}]
  %s6 = inlined_call_operand.vmem [shape: bf16[8,288], index: 6, kind: input, shape index: {}]
  %s7 = inlined_call_operand.vmem [shape: f32[8,1], index: 7, kind: input, shape index: {}]
  %s8 = inlined_call_operand.hbm [shape: f32[4,512], index: 8, kind: output, shape index: {}]
  %s9 = sld [smem:[#allocation0]]
  $region54: #{tpu_custom_call.1} parent=0
    _
  %s11 = ssub.s32 1, %s9
  %s12 = scalar_select 0, %s11, %s9
  $region1: #{tpu_custom_call.1} parent=0
    #allocation3 [shape = 'u8[8192]{0}', space=vmem, size = 0x2000, scoped, tag = 'input window, operand 1, single buffered']
    #allocation4 [shape = 's32[1]{0}', space=sflag, size = 0x4, scoped, tag = 'scoped memory for tpu_custom_call.1']
    #allocation5 [shape = 's32[1]{0}', space=sflag, size = 0x4, scoped, tag = 'scoped memory for tpu_custom_call.1']
    #allocation6 [shape = 'u8[32768]{0}', space=vmem, size = 0x8000, scoped, tag = 'input window, operand 2, single buffered']
    #allocation7 [shape = 's32[1]{0}', space=sflag, size = 0x4, scoped, tag = 'scoped memory for tpu_custom_call.1']
    #allocation8 [shape = 'u8[4096]{0}', space=vmem, size = 0x1000, scoped, tag = 'input window, operand 3, single buffered']
    #allocation9 [shape = 'u8[8192]{0}', space=vmem, size = 0x2000, scoped, tag = 'output window, operand 0, single buffered']
    %13 = vsyncpa [#allocation4], 0
    %14 = vsyncpa [#allocation7], 0
    %15 = vsyncpa [#allocation5], 0
    // Predicated region
    $region2: #{tpu_custom_call.1} parent=1 // pred_check
      _
    $region3: #{tpu_custom_call.1} parent=1 // pred_check_branch
      %17 = sbr.rel (0) target = $region5
    $region4: #{tpu_custom_call.1} parent=1 // pred_region
      _
    $region5: #{tpu_custom_call.1} parent=1 // pred_fallthru
      _
    // Predicated region
    $region6: #{tpu_custom_call.1} parent=1 // pred_check
      _
    $region7: #{tpu_custom_call.1} parent=1 // pred_check_branch
      %19 = sbr.rel (0) target = $region9
    $region8: #{tpu_custom_call.1} parent=1 // pred_region
      %s21 = ssub.s32 256, 256
      %22 = vsyncadd [#allocation4], %s21
      %s24 = sshll.u32 [#allocation3], 4
      %s25 = int_to_ptr.vmem [resolvable:$true] %s24
      %27 = dma.hbm_to_vmem [thread:$0]  %s1, 256, %s25, [#allocation4]
    $region9: #{tpu_custom_call.1} parent=1 // pred_fallthru
      _
    // Predicated region
    $region10: #{tpu_custom_call.1} parent=1 // pred_check
      _
    $region11: #{tpu_custom_call.1} parent=1 // pred_check_branch
      %29 = sbr.rel (0) target = $region13
    $region12: #{tpu_custom_call.1} parent=1 // pred_region
      %s31 = ssub.s32 1024, 1024
      %32 = vsyncadd [#allocation7], %s31
      %s33 = sshll.u32 [#allocation6], 4
      %s34 = int_to_ptr.vmem [resolvable:$true] %s33
      %39 = dma.hbm_to_vmem [thread:$0]  %s2, 1024, %s34, [#allocation7], 512, 512, 32
    $region13: #{tpu_custom_call.1} parent=1 // pred_fallthru
      _
    // Predicated region
    $region14: #{tpu_custom_call.1} parent=1 // pred_check
      _
    $region15: #{tpu_custom_call.1} parent=1 // pred_check_branch
      %41 = sbr.rel (0) target = $region17
    $region16: #{tpu_custom_call.1} parent=1 // pred_region
      %s43 = ssub.s32 128, 128
      %44 = vsyncadd [#allocation7], %s43
      %s46 = sshll.u32 [#allocation8], 4
      %s47 = int_to_ptr.vmem [resolvable:$true] %s46
      %49 = dma.hbm_to_vmem [thread:$0]  %s3, 128, %s47, [#allocation7]
    $region17: #{tpu_custom_call.1} parent=1 // pred_fallthru
      _
    // Predicated region
    $region18: #{tpu_custom_call.1} parent=1 // pred_check
      _
    $region19: #{tpu_custom_call.1} parent=1 // pred_check_branch
      %51 = sbr.rel (0) target = $region21
    $region20: #{tpu_custom_call.1} parent=1 // pred_region
      _
    $region21: #{tpu_custom_call.1} parent=1 // pred_fallthru
      _
    // Predicated region
    $region22: #{tpu_custom_call.1} parent=1 // pred_check
      _
    $region23: #{tpu_custom_call.1} parent=1 // pred_check_branch
      %53 = sbr.rel (0) target = $region25
    $region24: #{tpu_custom_call.1} parent=1 // pred_region
      _
    $region25: #{tpu_custom_call.1} parent=1 // pred_fallthru
      _
    // Predicated region
    $region26: #{tpu_custom_call.1} parent=1 // pred_check
      _
    $region27: #{tpu_custom_call.1} parent=1 // pred_check_branch
      %55 = sbr.rel (0) target = $region29
    $region28: #{tpu_custom_call.1} parent=1 // pred_region
      _
    $region29: #{tpu_custom_call.1} parent=1 // pred_fallthru
      _
    // Predicated region
    $region30: #{tpu_custom_call.1} parent=1 // pred_check
      _
    $region31: #{tpu_custom_call.1} parent=1 // pred_check_branch
      %57 = sbr.rel (0) target = $region33
    $region32: #{tpu_custom_call.1} parent=1 // pred_region
      _
    $region33: #{tpu_custom_call.1} parent=1 // pred_fallthru
      _
    // Predicated region
    $region34: #{tpu_custom_call.1} parent=1 // pred_check
      _
    $region35: #{tpu_custom_call.1} parent=1 // pred_check_branch
      %59 = sbr.rel (0) target = $region37
    $region36: #{tpu_custom_call.1} parent=1 // pred_region
      %60 = dma.done [#allocation4], 256
    $region37: #{tpu_custom_call.1} parent=1 // pred_fallthru
      _
    // Predicated region
    $region38: #{tpu_custom_call.1} parent=1 // pred_check
      _
    $region39: #{tpu_custom_call.1} parent=1 // pred_check_branch
      %62 = sbr.rel (0) target = $region41
    $region40: #{tpu_custom_call.1} parent=1 // pred_region
      %63 = dma.done [#allocation7], 1024
    $region41: #{tpu_custom_call.1} parent=1 // pred_fallthru
      _
    // Predicated region
    $region42: #{tpu_custom_call.1} parent=1 // pred_check
      _
    $region43: #{tpu_custom_call.1} parent=1 // pred_check_branch
      %65 = sbr.rel (0) target = $region45
    $region44: #{tpu_custom_call.1} parent=1 // pred_region
      %66 = dma.done [#allocation7], 128
    $region45: #{tpu_custom_call.1} parent=1 // pred_fallthru
      _
    %v68 = vld [vmem:[#allocation6] sm:$0xff]
    %v69 = vld [vmem:[#allocation6 + $0x8] sm:$0xff]
    %v70 = vld [vmem:[#allocation6 + $0x10] sm:$0xff]
    %v71 = vld [vmem:[#allocation6 + $0x18] sm:$0xff]
    %v72 = vld [vmem:[#allocation6 + $0x20] sm:$0x1]
    %v73 = vld [vmem:[#allocation6 + $0x28] sm:$0x1]
    %v74 = vld [vmem:[#allocation6 + $0x30] sm:$0x1]
    %v75 = vld [vmem:[#allocation6 + $0x38] sm:$0x1]
    %v76 = vld [vmem:[%s0] sm:$0xff]
    %v77 = vld [vmem:[%s0 + $0x8] sm:$0xff]
    %v78 = vld [vmem:[%s0 + $0x10] sm:$0xff]
    %v79 = vld [vmem:[%s0 + $0x18] sm:$0xff]
    %80 = vrot.lane.b32.xlu0 %v76, 17
    %v81 = vpop.permute.xlu0 %80
    %82 = vrot.lane.b32.xlu0 %v77, 17
    %v83 = vpop.permute.xlu0 %82
    %84 = vrot.lane.b32.xlu0 %v78, 17
    %v85 = vpop.permute.xlu0 %84
    %86 = vrot.lane.b32.xlu0 %v79, 17
    %v87 = vpop.permute.xlu0 %86
    %v88 = vlaneseq
    %v89 = vand.u32 %v88, 127
    %vm90 = vcmp.lt.s32.totalorder %v89, 17
    %v91 = vsel %vm90, %v85, %v87
    %v92 = vsel %vm90, %v83, %v85
    %v93 = vsel %vm90, %v81, %v83
    %v94 = vsel %vm90, %v87, %v81
    %v95 = vlaneseq
    %v96 = vshrl.u32 %v95, 7
    %v97 = vsub.s32 0, %v96
    %v98 = vrot.slane %v68, %v97
    %v99 = vlaneseq
    %v100 = vshrl.u32 %v99, 7
    %v101 = vsub.s32 0, %v100
    %v102 = vrot.slane %v69, %v101
    %v103 = vlaneseq
    %v104 = vshrl.u32 %v103, 7
    %v105 = vsub.s32 0, %v104
    %v106 = vrot.slane %v70, %v105
    %v107 = vlaneseq
    %v108 = vshrl.u32 %v107, 7
    %v109 = vsub.s32 0, %v108
    %v110 = vrot.slane %v71, %v109
    %v111 = vmul.f32 %v94, %v98
    %v112 = vmul.f32 %v93, %v102
    %v113 = vmul.f32 %v92, %v106
    %v114 = vmul.f32 %v91, %v110
    %v115 = vpack.c.bf16 %v111, %v111
    %v116 = vpack.c.bf16 %v112, %v112
    %v117 = vpack.c.bf16 %v113, %v113
    %v118 = vpack.c.bf16 %v114, %v114
    %119 = vst [vmem:[#allocation2] sm:$0xf] %v115
    %120 = vst [vmem:[#allocation2 + $0x8] sm:$0xf] %v116
    %121 = vst [vmem:[#allocation2 + $0x10] sm:$0xf] %v117
    %122 = vst [vmem:[#allocation2 + $0x18] sm:$0xf] %v118
    %123 = vrot.lane.b32.xlu0 %v76, 16
    %v124 = vpop.permute.xlu0 %123
    %125 = vrot.lane.b32.xlu0 %v77, 16
    %v126 = vpop.permute.xlu0 %125
    %127 = vrot.lane.b32.xlu0 %v78, 16
    %v128 = vpop.permute.xlu0 %127
    %129 = vrot.lane.b32.xlu0 %v79, 16
    %v130 = vpop.permute.xlu0 %129
    %vm131 = vcmp.lt.s32.totalorder %v89, 16
    %v132 = vsel %vm131, %v128, %v130
    %v133 = vsel %vm131, %v126, %v128
    %v134 = vsel %vm131, %v124, %v126
    %v135 = vsel %vm131, %v130, %v124
    %v136 = vlaneseq
    %v137 = vshrl.u32 %v136, 7
    %v138 = vsub.s32 1, %v137
    %v139 = vrot.slane %v68, %v138
    %v140 = vlaneseq
    %v141 = vshrl.u32 %v140, 7
    %v142 = vsub.s32 1, %v141
    %v143 = vrot.slane %v69, %v142
    %v144 = vlaneseq
    %v145 = vshrl.u32 %v144, 7
    %v146 = vsub.s32 1, %v145
    %v147 = vrot.slane %v70, %v146
    %v148 = vlaneseq
    %v149 = vshrl.u32 %v148, 7
    %v150 = vsub.s32 1, %v149
    %v151 = vrot.slane %v71, %v150
    %v152 = vmul.f32 %v135, %v139
    %v153 = vmul.f32 %v134, %v143
    %v154 = vmul.f32 %v133, %v147
    %v155 = vmul.f32 %v132, %v151
    %v156 = vpack.c.bf16 %v152, %v152
    %v157 = vpack.c.bf16 %v153, %v153
    %v158 = vpack.c.bf16 %v154, %v154
    %v159 = vpack.c.bf16 %v155, %v155
    %v164 = vrot.slane %v156, 4
    %v165 = vrot.slane %v157, 4
    %v166 = vrot.slane %v158, 4
    %v167 = vrot.slane %v159, 4
    %172 = vst [vmem:[#allocation2] sm:$0xf0] %v164
    %173 = vst [vmem:[#allocation2 + $0x8] sm:$0xf0] %v165
    %174 = vst [vmem:[#allocation2 + $0x10] sm:$0xf0] %v166
    %175 = vst [vmem:[#allocation2 + $0x18] sm:$0xf0] %v167
    %176 = vrot.lane.b32.xlu0 %v76, 15
    %v177 = vpop.permute.xlu0 %176
    %178 = vrot.lane.b32.xlu0 %v77, 15
    %v179 = vpop.permute.xlu0 %178
    %180 = vrot.lane.b32.xlu0 %v78, 15
    %v181 = vpop.permute.xlu0 %180
    %182 = vrot.lane.b32.xlu0 %v79, 15
    %v183 = vpop.permute.xlu0 %182
    %vm184 = vcmp.lt.s32.totalorder %v89, 15
    %v185 = vsel %vm184, %v181, %v183
    %v186 = vsel %vm184, %v179, %v181
    %v187 = vsel %vm184, %v177, %v179
    %v188 = vsel %vm184, %v183, %v177
    %v189 = vlaneseq
    %v190 = vshrl.u32 %v189, 7
    %v191 = vsub.s32 2, %v190
    %v192 = vrot.slane %v68, %v191
    %v193 = vlaneseq
    %v194 = vshrl.u32 %v193, 7
    %v195 = vsub.s32 2, %v194
    %v196 = vrot.slane %v69, %v195
    %v197 = vlaneseq
    %v198 = vshrl.u32 %v197, 7
    %v199 = vsub.s32 2, %v198
    %v200 = vrot.slane %v70, %v199
    %v201 = vlaneseq
    %v202 = vshrl.u32 %v201, 7
    %v203 = vsub.s32 2, %v202
    %v204 = vrot.slane %v71, %v203
    %v205 = vmul.f32 %v188, %v192
    %v206 = vmul.f32 %v187, %v196
    %v207 = vmul.f32 %v186, %v200
    %v208 = vmul.f32 %v185, %v204
    %v209 = vpack.c.bf16 %v205, %v205
    %v210 = vpack.c.bf16 %v206, %v206
    %v211 = vpack.c.bf16 %v207, %v207
    %v212 = vpack.c.bf16 %v208, %v208
    %213 = vst [vmem:[#allocation2 + $0x20] sm:$0xf] %v209
    %214 = vst [vmem:[#allocation2 + $0x28] sm:$0xf] %v210
    %215 = vst [vmem:[#allocation2 + $0x30] sm:$0xf] %v211
    %216 = vst [vmem:[#allocation2 + $0x38] sm:$0xf] %v212
    %217 = vrot.lane.b32.xlu0 %v76, 1
    %v218 = vpop.permute.xlu0 %217
    %219 = vrot.lane.b32.xlu0 %v77, 1
    %v220 = vpop.permute.xlu0 %219
    %221 = vrot.lane.b32.xlu0 %v78, 1
    %v222 = vpop.permute.xlu0 %221
    %223 = vrot.lane.b32.xlu0 %v79, 1
    %v224 = vpop.permute.xlu0 %223
    %vm225 = vcmp.lt.s32.totalorder %v89, 1
    %v226 = vsel %vm225, %v222, %v224
    %v227 = vsel %vm225, %v220, %v222
    %v228 = vsel %vm225, %v218, %v220
    %v229 = vsel %vm225, %v224, %v218
    %v230 = vlaneseq
    %v231 = vshrl.u32 %v230, 7
    %v232 = vsub.s32 3, %v231
    %v233 = vrot.slane %v68, %v232
    %v234 = vlaneseq
    %v235 = vshrl.u32 %v234, 7
    %v236 = vsub.s32 3, %v235
    %v237 = vrot.slane %v69, %v236
    %v238 = vlaneseq
    %v239 = vshrl.u32 %v238, 7
    %v240 = vsub.s32 3, %v239
    %v241 = vrot.slane %v70, %v240
    %v242 = vlaneseq
    %v243 = vshrl.u32 %v242, 7
    %v244 = vsub.s32 3, %v243
    %v245 = vrot.slane %v71, %v244
    %v246 = vmul.f32 %v229, %v233
    %v247 = vmul.f32 %v228, %v237
    %v248 = vmul.f32 %v227, %v241
    %v249 = vmul.f32 %v226, %v245
    %v250 = vpack.c.bf16 %v246, %v246
    %v251 = vpack.c.bf16 %v247, %v247
    %v252 = vpack.c.bf16 %v248, %v248
    %v253 = vpack.c.bf16 %v249, %v249
    %v258 = vrot.slane %v250, 4
    %v259 = vrot.slane %v251, 4
    %v260 = vrot.slane %v252, 4
    %v261 = vrot.slane %v253, 4
    %266 = vst [vmem:[#allocation2 + $0x20] sm:$0xf0] %v258
    %267 = vst [vmem:[#allocation2 + $0x28] sm:$0xf0] %v259
    %268 = vst [vmem:[#allocation2 + $0x30] sm:$0xf0] %v260
    %269 = vst [vmem:[#allocation2 + $0x38] sm:$0xf0] %v261
    %v270 = vpack.c.bf16 %v76, %v76
    %v271 = vpack.c.bf16 %v77, %v77
    %v272 = vpack.c.bf16 %v78, %v78
    %v273 = vpack.c.bf16 %v79, %v79
    %274 = vst [vmem:[#allocation2 + $0x40] sm:$0xf] %v270
    %275 = vst [vmem:[#allocation2 + $0x48] sm:$0xf] %v271
    %276 = vst [vmem:[#allocation2 + $0x50] sm:$0xf] %v272
    %277 = vst [vmem:[#allocation2 + $0x58] sm:$0xf] %v273
    %278 = vrot.lane.b32.xlu0 %v76, 127
    %v279 = vpop.permute.xlu0 %278
    %280 = vrot.lane.b32.xlu0 %v77, 127
    %v281 = vpop.permute.xlu0 %280
    %282 = vrot.lane.b32.xlu0 %v78, 127
    %v283 = vpop.permute.xlu0 %282
    %284 = vrot.lane.b32.xlu0 %v79, 127
    %v285 = vpop.permute.xlu0 %284
    %vm286 = vcmp.lt.s32.totalorder %v89, 127
    %v287 = vsel %vm286, %v283, %v285
    %v288 = vsel %vm286, %v281, %v283
    %v289 = vsel %vm286, %v279, %v281
    %v290 = vsel %vm286, %v285, %v279
    %v291 = vlaneseq
    %v292 = vshrl.u32 %v291, 7
    %v293 = vsub.s32 5, %v292
    %v294 = vrot.slane %v68, %v293
    %v295 = vlaneseq
    %v296 = vshrl.u32 %v295, 7
    %v297 = vsub.s32 5, %v296
    %v298 = vrot.slane %v69, %v297
    %v299 = vlaneseq
    %v300 = vshrl.u32 %v299, 7
    %v301 = vsub.s32 5, %v300
    %v302 = vrot.slane %v70, %v301
    %v303 = vlaneseq
    %v304 = vshrl.u32 %v303, 7
    %v305 = vsub.s32 5, %v304
    %v306 = vrot.slane %v71, %v305
    %v307 = vmul.f32 %v289, %v294
    %v308 = vmul.f32 %v288, %v298
    %v309 = vmul.f32 %v287, %v302
    %v310 = vmul.f32 %v290, %v306
    %v311 = vpack.c.bf16 %v307, %v307
    %v312 = vpack.c.bf16 %v308, %v308
    %v313 = vpack.c.bf16 %v309, %v309
    %v314 = vpack.c.bf16 %v310, %v310
    %v319 = vrot.slane %v311, 4
    %v320 = vrot.slane %v312, 4
    %v321 = vrot.slane %v313, 4
    %v322 = vrot.slane %v314, 4
    %327 = vst [vmem:[#allocation2 + $0x40] sm:$0xf0] %v319
    %328 = vst [vmem:[#allocation2 + $0x48] sm:$0xf0] %v320
    %329 = vst [vmem:[#allocation2 + $0x50] sm:$0xf0] %v321
    %330 = vst [vmem:[#allocation2 + $0x58] sm:$0xf0] %v322
    %331 = vrot.lane.b32.xlu0 %v76, 113
    %v332 = vpop.permute.xlu0 %331
    %333 = vrot.lane.b32.xlu0 %v77, 113
    %v334 = vpop.permute.xlu0 %333
    %335 = vrot.lane.b32.xlu0 %v78, 113
    %v336 = vpop.permute.xlu0 %335
    %337 = vrot.lane.b32.xlu0 %v79, 113
    %v338 = vpop.permute.xlu0 %337
    %vm339 = vcmp.lt.s32.totalorder %v89, 113
    %v340 = vsel %vm339, %v336, %v338
    %v341 = vsel %vm339, %v334, %v336
    %v342 = vsel %vm339, %v332, %v334
    %v343 = vsel %vm339, %v338, %v332
    %v344 = vlaneseq
    %v345 = vshrl.u32 %v344, 7
    %v346 = vsub.s32 6, %v345
    %v347 = vrot.slane %v68, %v346
    %v348 = vlaneseq
    %v349 = vshrl.u32 %v348, 7
    %v350 = vsub.s32 6, %v349
    %v351 = vrot.slane %v69, %v350
    %v352 = vlaneseq
    %v353 = vshrl.u32 %v352, 7
    %v354 = vsub.s32 6, %v353
    %v355 = vrot.slane %v70, %v354
    %v356 = vlaneseq
    %v357 = vshrl.u32 %v356, 7
    %v358 = vsub.s32 6, %v357
    %v359 = vrot.slane %v71, %v358
    %v360 = vmul.f32 %v342, %v347
    %v361 = vmul.f32 %v341, %v351
    %v362 = vmul.f32 %v340, %v355
    %v363 = vmul.f32 %v343, %v359
    %v364 = vpack.c.bf16 %v360, %v360
    %v365 = vpack.c.bf16 %v361, %v361
    %v366 = vpack.c.bf16 %v362, %v362
    %v367 = vpack.c.bf16 %v363, %v363
    %368 = vst [vmem:[#allocation2 + $0x60] sm:$0xf] %v364
    %369 = vst [vmem:[#allocation2 + $0x68] sm:$0xf] %v365
    %370 = vst [vmem:[#allocation2 + $0x70] sm:$0xf] %v366
    %371 = vst [vmem:[#allocation2 + $0x78] sm:$0xf] %v367
    %372 = vrot.lane.b32.xlu0 %v76, 112
    %v373 = vpop.permute.xlu0 %372
    %374 = vrot.lane.b32.xlu0 %v77, 112
    %v375 = vpop.permute.xlu0 %374
    %376 = vrot.lane.b32.xlu0 %v78, 112
    %v377 = vpop.permute.xlu0 %376
    %378 = vrot.lane.b32.xlu0 %v79, 112
    %v379 = vpop.permute.xlu0 %378
    %vm380 = vcmp.lt.s32.totalorder %v89, 112
    %v381 = vsel %vm380, %v377, %v379
    %v382 = vsel %vm380, %v375, %v377
    %v383 = vsel %vm380, %v373, %v375
    %v384 = vsel %vm380, %v379, %v373
    %v385 = vlaneseq
    %v386 = vshrl.u32 %v385, 7
    %v387 = vsub.s32 7, %v386
    %v388 = vrot.slane %v68, %v387
    %v389 = vlaneseq
    %v390 = vshrl.u32 %v389, 7
    %v391 = vsub.s32 7, %v390
    %v392 = vrot.slane %v69, %v391
    %v393 = vlaneseq
    %v394 = vshrl.u32 %v393, 7
    %v395 = vsub.s32 7, %v394
    %v396 = vrot.slane %v70, %v395
    %v397 = vlaneseq
    %v398 = vshrl.u32 %v397, 7
    %v399 = vsub.s32 7, %v398
    %v400 = vrot.slane %v71, %v399
    %v401 = vmul.f32 %v383, %v388
    %v402 = vmul.f32 %v382, %v392
    %v403 = vmul.f32 %v381, %v396
    %v404 = vmul.f32 %v384, %v400
    %v405 = vpack.c.bf16 %v401, %v401
    %v406 = vpack.c.bf16 %v402, %v402
    %v407 = vpack.c.bf16 %v403, %v403
    %v408 = vpack.c.bf16 %v404, %v404
    %v413 = vrot.slane %v405, 4
    %v414 = vrot.slane %v406, 4
    %v415 = vrot.slane %v407, 4
    %v416 = vrot.slane %v408, 4
    %421 = vst [vmem:[#allocation2 + $0x60] sm:$0xf0] %v413
    %422 = vst [vmem:[#allocation2 + $0x68] sm:$0xf0] %v414
    %423 = vst [vmem:[#allocation2 + $0x70] sm:$0xf0] %v415
    %424 = vst [vmem:[#allocation2 + $0x78] sm:$0xf0] %v416
    %425 = vrot.lane.b32.xlu0 %v76, 111
    %v426 = vpop.permute.xlu0 %425
    %427 = vrot.lane.b32.xlu0 %v77, 111
    %v428 = vpop.permute.xlu0 %427
    %429 = vrot.lane.b32.xlu0 %v78, 111
    %v430 = vpop.permute.xlu0 %429
    %431 = vrot.lane.b32.xlu0 %v79, 111
    %v432 = vpop.permute.xlu0 %431
    %vm433 = vcmp.lt.s32.totalorder %v89, 111
    %v434 = vsel %vm433, %v430, %v432
    %v435 = vsel %vm433, %v428, %v430
    %v436 = vsel %vm433, %v426, %v428
    %v437 = vsel %vm433, %v432, %v426
    %v438 = vlaneseq
    %v439 = vshrl.u32 %v438, 7
    %v440 = vsub.s32 0, %v439
    %v441 = vrot.slane %v72, %v440
    %v442 = vlaneseq
    %v443 = vshrl.u32 %v442, 7
    %v444 = vsub.s32 0, %v443
    %v445 = vrot.slane %v73, %v444
    %v446 = vlaneseq
    %v447 = vshrl.u32 %v446, 7
    %v448 = vsub.s32 0, %v447
    %v449 = vrot.slane %v74, %v448
    %v450 = vlaneseq
    %v451 = vshrl.u32 %v450, 7
    %v452 = vsub.s32 0, %v451
    %v453 = vrot.slane %v75, %v452
    %v454 = vmul.f32 %v436, %v441
    %v455 = vmul.f32 %v435, %v445
    %v456 = vmul.f32 %v434, %v449
    %v457 = vmul.f32 %v437, %v453
    %v458 = vpack.c.bf16 %v454, %v454
    %v459 = vpack.c.bf16 %v455, %v455
    %v460 = vpack.c.bf16 %v456, %v456
    %v461 = vpack.c.bf16 %v457, %v457
    %462 = vst [vmem:[#allocation2 + $0x80] sm:$0xf] %v458
    %463 = vst [vmem:[#allocation2 + $0x88] sm:$0xf] %v459
    %464 = vst [vmem:[#allocation2 + $0x90] sm:$0xf] %v460
    %465 = vst [vmem:[#allocation2 + $0x98] sm:$0xf] %v461
    %v466 = vld [vmem:[%s4] sm:$0xf]
    %v467 = vld [vmem:[%s4 + $0x4] sm:$0xf]
    %v468 = vld [vmem:[%s4 + $0x8] sm:$0xf]
    %v469 = vld [vmem:[%s4 + $0xc] sm:$0xf]
    %v470 = vld [vmem:[#allocation2] sm:$0xff]
    %v471 = vld [vmem:[#allocation2 + $0x8] sm:$0xff]
    %v472 = vld [vmem:[#allocation2 + $0x10] sm:$0xff]
    %v473 = vld [vmem:[#allocation2 + $0x18] sm:$0xff]
    %v474 = vld [vmem:[#allocation2 + $0x20] sm:$0xff]
    %v475 = vld [vmem:[#allocation2 + $0x28] sm:$0xff]
    %v476 = vld [vmem:[#allocation2 + $0x30] sm:$0xff]
    %v477 = vld [vmem:[#allocation2 + $0x38] sm:$0xff]
    %v478 = vld [vmem:[#allocation2 + $0x40] sm:$0xff]
    %v479 = vld [vmem:[#allocation2 + $0x48] sm:$0xff]
    %v480 = vld [vmem:[#allocation2 + $0x50] sm:$0xff]
    %v481 = vld [vmem:[#allocation2 + $0x58] sm:$0xff]
    %v482 = vld [vmem:[#allocation2 + $0x60] sm:$0xff]
    %v483 = vld [vmem:[#allocation2 + $0x68] sm:$0xff]
    %v484 = vld [vmem:[#allocation2 + $0x70] sm:$0xff]
    %v485 = vld [vmem:[#allocation2 + $0x78] sm:$0xff]
    %v486 = vld [vmem:[#allocation2 + $0x80] sm:$0xf]
    %v487 = vld [vmem:[#allocation2 + $0x88] sm:$0xf]
    %v488 = vld [vmem:[#allocation2 + $0x90] sm:$0xf]
    %v489 = vld [vmem:[#allocation2 + $0x98] sm:$0xf]
    %v490 = vld [vmem:[%s5] sm:$0xff]
    %v491 = vld [vmem:[%s5 + $0x8] sm:$0xff]
    %v492 = vld [vmem:[%s5 + $0x10] sm:$0xff]
    %v493 = vld [vmem:[%s5 + $0x18] sm:$0xff]
    %495 = vset.pattern.permute.xlu0 0
    %496 = vperm.xlu0 %495, %v490
    %v497 = vpop.permute.xlu0 %496
    %500 = vset.pattern.permute.xlu0 0
    %501 = vperm.xlu0 %500, %v491
    %v502 = vpop.permute.xlu0 %501
    %505 = vset.pattern.permute.xlu0 0
    %506 = vperm.xlu0 %505, %v492
    %v507 = vpop.permute.xlu0 %506
    %510 = vset.pattern.permute.xlu0 0
    %511 = vperm.xlu0 %510, %v493
    %v512 = vpop.permute.xlu0 %511
    %v518 = vunpack.c.l.b16 %v466
    %v519 = vunpack.c.l.b16 %v467
    %v520 = vunpack.c.l.b16 %v468
    %v521 = vunpack.c.l.b16 %v469
    %v522 = vpack.c.b16 %v519, %v518
    %v523 = vpack.c.b16 %v521, %v520
    %vm524 = vcmask 588800
    %v526 = vsel %vm524, %v522, 0
    %v529 = vsel %vm524, %v523, 0
    %vm531 = vcmask 1043456
    %v533 = vsel %vm531, %v486, 0
    %v536 = vsel %vm531, %v487, 0
    %v539 = vsel %vm531, %v488, 0
    %v542 = vsel %vm531, %v489, 0
    %544 = vmatprep.subr.bf16.mxu0 %v471
    %545 = vmatpush1.bf16.msra.mxu0 %v470
    %546 = vmatprep.subr.bf16.mxu0 %v475
    %547 = vmatpush1.bf16.msra.mxu0 %v474
    %548 = vmatprep.subr.bf16.mxu0 %v479
    %549 = vmatpush1.bf16.msra.mxu0 %v478
    %550 = vmatprep.subr.bf16.mxu0 %v483
    %551 = vmatpush1.bf16.msra.mxu0 %v482
    %552 = vmatprep.subr.bf16.mxu0 %v536
    %553 = vmatpush1.bf16.msra.mxu0 %v533
    %554 = vmatprep.subr.bf16.mxu0 0
    %555 = vmatpush1.bf16.msra.mxu0 0
    %556 = vmatprep.subr.bf16.mxu0 0
    %557 = vmatpush1.bf16.msra.mxu0 0
    %558 = vmatprep.subr.bf16.mxu0 0
    %559 = vmatpush1.bf16.msra.mxu0 0
    %560 = vmatprep.subr.bf16.mxu0 0
    %561 = vmatpush1.bf16.msra.mxu0 0
    %562 = vmatprep.subr.bf16.mxu0 0
    %563 = vmatpush1.bf16.msra.mxu0 0
    %564 = vmatprep.subr.bf16.mxu0 0
    %565 = vmatpush1.bf16.msra.mxu0 0
    %566 = vmatprep.subr.bf16.mxu0 0
    %567 = vmatpush1.bf16.msra.mxu0 0
    %568 = vmatprep.subr.bf16.mxu0 0
    %569 = vmatpush1.bf16.msra.mxu0 0
    %570 = vmatprep.subr.bf16.mxu0 0
    %571 = vmatpush1.bf16.msra.mxu0 0
    %572 = vmatprep.subr.bf16.mxu0 0
    %573 = vmatpush1.bf16.msra.mxu0 0
    %574 = vmatprep.subr.bf16.mxu0 0
    %575 = vmatpush1.bf16.msra.mxu0 0
    %576 = vmatprep.mubr.bf16.mxu0 0
    %577 = vmatmul.mubr.bf16.gmra.mrb[0].mxu0 %v526
    %v578 = vpop.f32.mrb[0].mxu0
    %v579 = vadd.f32 %v497, %v578
    %v580 = vpop.f32.mrb[0].mxu0
    %v581 = vadd.f32 %v497, %v580
    %v582 = vpop.f32.mrb[0].mxu0
    %v583 = vadd.f32 %v502, %v582
    %v584 = vpop.f32.mrb[0].mxu0
    %v585 = vadd.f32 %v502, %v584
    %586 = vmatprep.mubr.bf16.mxu0 0
    %587 = vmatmul.mubr.bf16.gmra.mrb[0].mxu0 %v529
    %v588 = vpop.f32.mrb[0].mxu0
    %v589 = vadd.f32 %v507, %v588
    %v590 = vpop.f32.mrb[0].mxu0
    %v591 = vadd.f32 %v507, %v590
    %v592 = vpop.f32.mrb[0].mxu0
    %v593 = vadd.f32 %v512, %v592
    %v594 = vpop.f32.mrb[0].mxu0
    %v595 = vadd.f32 %v512, %v594
    %596 = vdwg.mxu0
    %597 = vmatprep.subr.bf16.mxu0 %v473
    %598 = vmatpush1.bf16.msra.mxu0 %v472
    %599 = vmatprep.subr.bf16.mxu0 %v477
    %600 = vmatpush1.bf16.msra.mxu0 %v476
    %601 = vmatprep.subr.bf16.mxu0 %v481
    %602 = vmatpush1.bf16.msra.mxu0 %v480
    %603 = vmatprep.subr.bf16.mxu0 %v485
    %604 = vmatpush1.bf16.msra.mxu0 %v484
    %605 = vmatprep.subr.bf16.mxu0 %v542
    %606 = vmatpush1.bf16.msra.mxu0 %v539
    %607 = vmatprep.subr.bf16.mxu0 0
    %608 = vmatpush1.bf16.msra.mxu0 0
    %609 = vmatprep.subr.bf16.mxu0 0
    %610 = vmatpush1.bf16.msra.mxu0 0
    %611 = vmatprep.subr.bf16.mxu0 0
    %612 = vmatpush1.bf16.msra.mxu0 0
    %613 = vmatprep.subr.bf16.mxu0 0
    %614 = vmatpush1.bf16.msra.mxu0 0
    %615 = vmatprep.subr.bf16.mxu0 0
    %616 = vmatpush1.bf16.msra.mxu0 0
    %617 = vmatprep.subr.bf16.mxu0 0
    %618 = vmatpush1.bf16.msra.mxu0 0
    %619 = vmatprep.subr.bf16.mxu0 0
    %620 = vmatpush1.bf16.msra.mxu0 0
    %621 = vmatprep.subr.bf16.mxu0 0
    %622 = vmatpush1.bf16.msra.mxu0 0
    %623 = vmatprep.subr.bf16.mxu0 0
    %624 = vmatpush1.bf16.msra.mxu0 0
    %625 = vmatprep.subr.bf16.mxu0 0
    %626 = vmatpush1.bf16.msra.mxu0 0
    %627 = vmatprep.subr.bf16.mxu0 0
    %628 = vmatpush1.bf16.msra.mxu0 0
    %629 = vmatprep.mubr.bf16.mxu0 0
    %630 = vmatmul.mubr.bf16.gmra.mrb[0].mxu0 %v526
    %v631 = vpop.f32.mrb[0].mxu0
    %v632 = vadd.f32 %v497, %v631
    %v633 = vpop.f32.mrb[0].mxu0
    %v634 = vadd.f32 %v497, %v633
    %v635 = vpop.f32.mrb[0].mxu0
    %v636 = vadd.f32 %v502, %v635
    %v637 = vpop.f32.mrb[0].mxu0
    %v638 = vadd.f32 %v502, %v637
    %639 = vmatprep.mubr.bf16.mxu0 0
    %640 = vmatmul.mubr.bf16.gmra.mrb[0].mxu0 %v529
    %v641 = vpop.f32.mrb[0].mxu0
    %v642 = vadd.f32 %v507, %v641
    %v643 = vpop.f32.mrb[0].mxu0
    %v644 = vadd.f32 %v507, %v643
    %v645 = vpop.f32.mrb[0].mxu0
    %v646 = vadd.f32 %v512, %v645
    %v647 = vpop.f32.mrb[0].mxu0
    %v648 = vadd.f32 %v512, %v647
    %649 = vdwg.mxu0
    %v650 = vmax.f32 %v579, 0.0
    %v651 = vmax.f32 %v581, 0.0
    %v652 = vmax.f32 %v632, 0.0
    %v653 = vmax.f32 %v634, 0.0
    %v654 = vmax.f32 %v583, 0.0
    %v655 = vmax.f32 %v585, 0.0
    %v656 = vmax.f32 %v636, 0.0
    %v657 = vmax.f32 %v638, 0.0
    %v658 = vmax.f32 %v589, 0.0
    %v659 = vmax.f32 %v591, 0.0
    %v660 = vmax.f32 %v642, 0.0
    %v661 = vmax.f32 %v644, 0.0
    %v662 = vmax.f32 %v593, 0.0
    %v663 = vmax.f32 %v595, 0.0
    %v664 = vmax.f32 %v646, 0.0
    %v665 = vmax.f32 %v648, 0.0
    %666 = vrot.lane.b32.xlu0 %v650, 17
    %v667 = vpop.permute.xlu0 %666
    %668 = vrot.lane.b32.xlu0 %v654, 17
    %v669 = vpop.permute.xlu0 %668
    %670 = vrot.lane.b32.xlu0 %v658, 17
    %v671 = vpop.permute.xlu0 %670
    %672 = vrot.lane.b32.xlu0 %v662, 17
    %v673 = vpop.permute.xlu0 %672
    %674 = vrot.lane.b32.xlu0 %v651, 17
    %v675 = vpop.permute.xlu0 %674
    %676 = vrot.lane.b32.xlu0 %v655, 17
    %v677 = vpop.permute.xlu0 %676
    %678 = vrot.lane.b32.xlu0 %v659, 17
    %v679 = vpop.permute.xlu0 %678
    %680 = vrot.lane.b32.xlu0 %v663, 17
    %v681 = vpop.permute.xlu0 %680
    %682 = vrot.lane.b32.xlu0 %v652, 17
    %v683 = vpop.permute.xlu0 %682
    %684 = vrot.lane.b32.xlu0 %v656, 17
    %v685 = vpop.permute.xlu0 %684
    %686 = vrot.lane.b32.xlu0 %v660, 17
    %v687 = vpop.permute.xlu0 %686
    %688 = vrot.lane.b32.xlu0 %v664, 17
    %v689 = vpop.permute.xlu0 %688
    %690 = vrot.lane.b32.xlu0 %v653, 17
    %v691 = vpop.permute.xlu0 %690
    %692 = vrot.lane.b32.xlu0 %v657, 17
    %v693 = vpop.permute.xlu0 %692
    %694 = vrot.lane.b32.xlu0 %v661, 17
    %v695 = vpop.permute.xlu0 %694
    %696 = vrot.lane.b32.xlu0 %v665, 17
    %v697 = vpop.permute.xlu0 %696
    %v698 = vsel %vm90, %v683, %v691
    %v699 = vsel %vm90, %v685, %v693
    %v700 = vsel %vm90, %v687, %v695
    %v701 = vsel %vm90, %v689, %v697
    %v702 = vsel %vm90, %v675, %v683
    %v703 = vsel %vm90, %v677, %v685
    %v704 = vsel %vm90, %v679, %v687
    %v705 = vsel %vm90, %v681, %v689
    %v706 = vsel %vm90, %v667, %v675
    %v707 = vsel %vm90, %v669, %v677
    %v708 = vsel %vm90, %v671, %v679
    %v709 = vsel %vm90, %v673, %v681
    %v710 = vsel %vm90, %v691, %v667
    %v711 = vsel %vm90, %v693, %v669
    %v712 = vsel %vm90, %v695, %v671
    %v713 = vsel %vm90, %v697, %v673
    %v714 = vmul.f32 %v710, %v98
    %v715 = vmul.f32 %v706, %v102
    %v716 = vmul.f32 %v702, %v106
    %v717 = vmul.f32 %v698, %v110
    %v718 = vmul.f32 %v711, %v98
    %v719 = vmul.f32 %v707, %v102
    %v720 = vmul.f32 %v703, %v106
    %v721 = vmul.f32 %v699, %v110
    %v722 = vmul.f32 %v712, %v98
    %v723 = vmul.f32 %v708, %v102
    %v724 = vmul.f32 %v704, %v106
    %v725 = vmul.f32 %v700, %v110
    %v726 = vmul.f32 %v713, %v98
    %v727 = vmul.f32 %v709, %v102
    %v728 = vmul.f32 %v705, %v106
    %v729 = vmul.f32 %v701, %v110
    %v730 = vpack.c.bf16 %v718, %v714
    %v731 = vpack.c.bf16 %v719, %v715
    %v732 = vpack.c.bf16 %v720, %v716
    %v733 = vpack.c.bf16 %v721, %v717
    %v734 = vpack.c.bf16 %v726, %v722
    %v735 = vpack.c.bf16 %v727, %v723
    %v736 = vpack.c.bf16 %v728, %v724
    %v737 = vpack.c.bf16 %v729, %v725
    %738 = vst [vmem:[#allocation2] sm:$0xff] %v730
    %739 = vst [vmem:[#allocation2 + $0x8] sm:$0xff] %v731
    %740 = vst [vmem:[#allocation2 + $0x10] sm:$0xff] %v732
    %741 = vst [vmem:[#allocation2 + $0x18] sm:$0xff] %v733
    %742 = vst [vmem:[#allocation2 + $0x20] sm:$0xff] %v734
    %743 = vst [vmem:[#allocation2 + $0x28] sm:$0xff] %v735
    %744 = vst [vmem:[#allocation2 + $0x30] sm:$0xff] %v736
    %745 = vst [vmem:[#allocation2 + $0x38] sm:$0xff] %v737
    %746 = vrot.lane.b32.xlu0 %v650, 16
    %v747 = vpop.permute.xlu0 %746
    %748 = vrot.lane.b32.xlu0 %v654, 16
    %v749 = vpop.permute.xlu0 %748
    %750 = vrot.lane.b32.xlu0 %v658, 16
    %v751 = vpop.permute.xlu0 %750
    %752 = vrot.lane.b32.xlu0 %v662, 16
    %v753 = vpop.permute.xlu0 %752
    %754 = vrot.lane.b32.xlu0 %v651, 16
    %v755 = vpop.permute.xlu0 %754
    %756 = vrot.lane.b32.xlu0 %v655, 16
    %v757 = vpop.permute.xlu0 %756
    %758 = vrot.lane.b32.xlu0 %v659, 16
    %v759 = vpop.permute.xlu0 %758
    %760 = vrot.lane.b32.xlu0 %v663, 16
    %v761 = vpop.permute.xlu0 %760
    %762 = vrot.lane.b32.xlu0 %v652, 16
    %v763 = vpop.permute.xlu0 %762
    %764 = vrot.lane.b32.xlu0 %v656, 16
    %v765 = vpop.permute.xlu0 %764
    %766 = vrot.lane.b32.xlu0 %v660, 16
    %v767 = vpop.permute.xlu0 %766
    %768 = vrot.lane.b32.xlu0 %v664, 16
    %v769 = vpop.permute.xlu0 %768
    %770 = vrot.lane.b32.xlu0 %v653, 16
    %v771 = vpop.permute.xlu0 %770
    %772 = vrot.lane.b32.xlu0 %v657, 16
    %v773 = vpop.permute.xlu0 %772
    %774 = vrot.lane.b32.xlu0 %v661, 16
    %v775 = vpop.permute.xlu0 %774
    %776 = vrot.lane.b32.xlu0 %v665, 16
    %v777 = vpop.permute.xlu0 %776
    %v778 = vsel %vm131, %v763, %v771
    %v779 = vsel %vm131, %v765, %v773
    %v780 = vsel %vm131, %v767, %v775
    %v781 = vsel %vm131, %v769, %v777
    %v782 = vsel %vm131, %v755, %v763
    %v783 = vsel %vm131, %v757, %v765
    %v784 = vsel %vm131, %v759, %v767
    %v785 = vsel %vm131, %v761, %v769
    %v786 = vsel %vm131, %v747, %v755
    %v787 = vsel %vm131, %v749, %v757
    %v788 = vsel %vm131, %v751, %v759
    %v789 = vsel %vm131, %v753, %v761
    %v790 = vsel %vm131, %v771, %v747
    %v791 = vsel %vm131, %v773, %v749
    %v792 = vsel %vm131, %v775, %v751
    %v793 = vsel %vm131, %v777, %v753
    %v794 = vmul.f32 %v790, %v139
    %v795 = vmul.f32 %v786, %v143
    %v796 = vmul.f32 %v782, %v147
    %v797 = vmul.f32 %v778, %v151
    %v798 = vmul.f32 %v791, %v139
    %v799 = vmul.f32 %v787, %v143
    %v800 = vmul.f32 %v783, %v147
    %v801 = vmul.f32 %v779, %v151
    %v802 = vmul.f32 %v792, %v139
    %v803 = vmul.f32 %v788, %v143
    %v804 = vmul.f32 %v784, %v147
    %v805 = vmul.f32 %v780, %v151
    %v806 = vmul.f32 %v793, %v139
    %v807 = vmul.f32 %v789, %v143
    %v808 = vmul.f32 %v785, %v147
    %v809 = vmul.f32 %v781, %v151
    %v810 = vpack.c.bf16 %v798, %v794
    %v811 = vpack.c.bf16 %v799, %v795
    %v812 = vpack.c.bf16 %v800, %v796
    %v813 = vpack.c.bf16 %v801, %v797
    %v814 = vpack.c.bf16 %v806, %v802
    %v815 = vpack.c.bf16 %v807, %v803
    %v816 = vpack.c.bf16 %v808, %v804
    %v817 = vpack.c.bf16 %v809, %v805
    %818 = vst [vmem:[#allocation2 + $0x40] sm:$0xff] %v810
    %819 = vst [vmem:[#allocation2 + $0x48] sm:$0xff] %v811
    %820 = vst [vmem:[#allocation2 + $0x50] sm:$0xff] %v812
    %821 = vst [vmem:[#allocation2 + $0x58] sm:$0xff] %v813
    %822 = vst [vmem:[#allocation2 + $0x60] sm:$0xff] %v814
    %823 = vst [vmem:[#allocation2 + $0x68] sm:$0xff] %v815
    %824 = vst [vmem:[#allocation2 + $0x70] sm:$0xff] %v816
    %825 = vst [vmem:[#allocation2 + $0x78] sm:$0xff] %v817
    %826 = vrot.lane.b32.xlu0 %v650, 15
    %v827 = vpop.permute.xlu0 %826
    %828 = vrot.lane.b32.xlu0 %v654, 15
    %v829 = vpop.permute.xlu0 %828
    %830 = vrot.lane.b32.xlu0 %v658, 15
    %v831 = vpop.permute.xlu0 %830
    %832 = vrot.lane.b32.xlu0 %v662, 15
    %v833 = vpop.permute.xlu0 %832
    %834 = vrot.lane.b32.xlu0 %v651, 15
    %v835 = vpop.permute.xlu0 %834
    %836 = vrot.lane.b32.xlu0 %v655, 15
    %v837 = vpop.permute.xlu0 %836
    %838 = vrot.lane.b32.xlu0 %v659, 15
    %v839 = vpop.permute.xlu0 %838
    %840 = vrot.lane.b32.xlu0 %v663, 15
    %v841 = vpop.permute.xlu0 %840
    %842 = vrot.lane.b32.xlu0 %v652, 15
    %v843 = vpop.permute.xlu0 %842
    %844 = vrot.lane.b32.xlu0 %v656, 15
    %v845 = vpop.permute.xlu0 %844
    %846 = vrot.lane.b32.xlu0 %v660, 15
    %v847 = vpop.permute.xlu0 %846
    %848 = vrot.lane.b32.xlu0 %v664, 15
    %v849 = vpop.permute.xlu0 %848
    %850 = vrot.lane.b32.xlu0 %v653, 15
    %v851 = vpop.permute.xlu0 %850
    %852 = vrot.lane.b32.xlu0 %v657, 15
    %v853 = vpop.permute.xlu0 %852
    %854 = vrot.lane.b32.xlu0 %v661, 15
    %v855 = vpop.permute.xlu0 %854
    %856 = vrot.lane.b32.xlu0 %v665, 15
    %v857 = vpop.permute.xlu0 %856
    %v858 = vsel %vm184, %v843, %v851
    %v859 = vsel %vm184, %v845, %v853
    %v860 = vsel %vm184, %v847, %v855
    %v861 = vsel %vm184, %v849, %v857
    %v862 = vsel %vm184, %v835, %v843
    %v863 = vsel %vm184, %v837, %v845
    %v864 = vsel %vm184, %v839, %v847
    %v865 = vsel %vm184, %v841, %v849
    %v866 = vsel %vm184, %v827, %v835
    %v867 = vsel %vm184, %v829, %v837
    %v868 = vsel %vm184, %v831, %v839
    %v869 = vsel %vm184, %v833, %v841
    %v870 = vsel %vm184, %v851, %v827
    %v871 = vsel %vm184, %v853, %v829
    %v872 = vsel %vm184, %v855, %v831
    %v873 = vsel %vm184, %v857, %v833
    %v874 = vmul.f32 %v870, %v192
    %v875 = vmul.f32 %v866, %v196
    %v876 = vmul.f32 %v862, %v200
    %v877 = vmul.f32 %v858, %v204
    %v878 = vmul.f32 %v871, %v192
    %v879 = vmul.f32 %v867, %v196
    %v880 = vmul.f32 %v863, %v200
    %v881 = vmul.f32 %v859, %v204
    %v882 = vmul.f32 %v872, %v192
    %v883 = vmul.f32 %v868, %v196
    %v884 = vmul.f32 %v864, %v200
    %v885 = vmul.f32 %v860, %v204
    %v886 = vmul.f32 %v873, %v192
    %v887 = vmul.f32 %v869, %v196
    %v888 = vmul.f32 %v865, %v200
    %v889 = vmul.f32 %v861, %v204
    %v890 = vpack.c.bf16 %v878, %v874
    %v891 = vpack.c.bf16 %v879, %v875
    %v892 = vpack.c.bf16 %v880, %v876
    %v893 = vpack.c.bf16 %v881, %v877
    %v894 = vpack.c.bf16 %v886, %v882
    %v895 = vpack.c.bf16 %v887, %v883
    %v896 = vpack.c.bf16 %v888, %v884
    %v897 = vpack.c.bf16 %v889, %v885
    %898 = vst [vmem:[#allocation2 + $0x80] sm:$0xff] %v890
    %899 = vst [vmem:[#allocation2 + $0x88] sm:$0xff] %v891
    %900 = vst [vmem:[#allocation2 + $0x90] sm:$0xff] %v892
    %901 = vst [vmem:[#allocation2 + $0x98] sm:$0xff] %v893
    %902 = vst [vmem:[#allocation2 + $0xa0] sm:$0xff] %v894
    %903 = vst [vmem:[#allocation2 + $0xa8] sm:$0xff] %v895
    %904 = vst [vmem:[#allocation2 + $0xb0] sm:$0xff] %v896
    %905 = vst [vmem:[#allocation2 + $0xb8] sm:$0xff] %v897
    %906 = vrot.lane.b32.xlu0 %v650, 1
    %v907 = vpop.permute.xlu0 %906
    %908 = vrot.lane.b32.xlu0 %v654, 1
    %v909 = vpop.permute.xlu0 %908
    %910 = vrot.lane.b32.xlu0 %v658, 1
    %v911 = vpop.permute.xlu0 %910
    %912 = vrot.lane.b32.xlu0 %v662, 1
    %v913 = vpop.permute.xlu0 %912
    %914 = vrot.lane.b32.xlu0 %v651, 1
    %v915 = vpop.permute.xlu0 %914
    %916 = vrot.lane.b32.xlu0 %v655, 1
    %v917 = vpop.permute.xlu0 %916
    %918 = vrot.lane.b32.xlu0 %v659, 1
    %v919 = vpop.permute.xlu0 %918
    %920 = vrot.lane.b32.xlu0 %v663, 1
    %v921 = vpop.permute.xlu0 %920
    %922 = vrot.lane.b32.xlu0 %v652, 1
    %v923 = vpop.permute.xlu0 %922
    %924 = vrot.lane.b32.xlu0 %v656, 1
    %v925 = vpop.permute.xlu0 %924
    %926 = vrot.lane.b32.xlu0 %v660, 1
    %v927 = vpop.permute.xlu0 %926
    %928 = vrot.lane.b32.xlu0 %v664, 1
    %v929 = vpop.permute.xlu0 %928
    %930 = vrot.lane.b32.xlu0 %v653, 1
    %v931 = vpop.permute.xlu0 %930
    %932 = vrot.lane.b32.xlu0 %v657, 1
    %v933 = vpop.permute.xlu0 %932
    %934 = vrot.lane.b32.xlu0 %v661, 1
    %v935 = vpop.permute.xlu0 %934
    %936 = vrot.lane.b32.xlu0 %v665, 1
    %v937 = vpop.permute.xlu0 %936
    %v938 = vsel %vm225, %v923, %v931
    %v939 = vsel %vm225, %v925, %v933
    %v940 = vsel %vm225, %v927, %v935
    %v941 = vsel %vm225, %v929, %v937
    %v942 = vsel %vm225, %v915, %v923
    %v943 = vsel %vm225, %v917, %v925
    %v944 = vsel %vm225, %v919, %v927
    %v945 = vsel %vm225, %v921, %v929
    %v946 = vsel %vm225, %v907, %v915
    %v947 = vsel %vm225, %v909, %v917
    %v948 = vsel %vm225, %v911, %v919
    %v949 = vsel %vm225, %v913, %v921
    %v950 = vsel %vm225, %v931, %v907
    %v951 = vsel %vm225, %v933, %v909
    %v952 = vsel %vm225, %v935, %v911
    %v953 = vsel %vm225, %v937, %v913
    %v954 = vmul.f32 %v950, %v233
    %v955 = vmul.f32 %v946, %v237
    %v956 = vmul.f32 %v942, %v241
    %v957 = vmul.f32 %v938, %v245
    %v958 = vmul.f32 %v951, %v233
    %v959 = vmul.f32 %v947, %v237
    %v960 = vmul.f32 %v943, %v241
    %v961 = vmul.f32 %v939, %v245
    %v962 = vmul.f32 %v952, %v233
    %v963 = vmul.f32 %v948, %v237
    %v964 = vmul.f32 %v944, %v241
    %v965 = vmul.f32 %v940, %v245
    %v966 = vmul.f32 %v953, %v233
    %v967 = vmul.f32 %v949, %v237
    %v968 = vmul.f32 %v945, %v241
    %v969 = vmul.f32 %v941, %v245
    %v970 = vpack.c.bf16 %v958, %v954
    %v971 = vpack.c.bf16 %v959, %v955
    %v972 = vpack.c.bf16 %v960, %v956
    %v973 = vpack.c.bf16 %v961, %v957
    %v974 = vpack.c.bf16 %v966, %v962
    %v975 = vpack.c.bf16 %v967, %v963
    %v976 = vpack.c.bf16 %v968, %v964
    %v977 = vpack.c.bf16 %v969, %v965
    %978 = vst [vmem:[#allocation2 + $0xc0] sm:$0xff] %v970
    %979 = vst [vmem:[#allocation2 + $0xc8] sm:$0xff] %v971
    %980 = vst [vmem:[#allocation2 + $0xd0] sm:$0xff] %v972
    %981 = vst [vmem:[#allocation2 + $0xd8] sm:$0xff] %v973
    %982 = vst [vmem:[#allocation2 + $0xe0] sm:$0xff] %v974
    %983 = vst [vmem:[#allocation2 + $0xe8] sm:$0xff] %v975
    %984 = vst [vmem:[#allocation2 + $0xf0] sm:$0xff] %v976
    %985 = vst [vmem:[#allocation2 + $0xf8] sm:$0xff] %v977
    %v986 = vpack.c.bf16 %v654, %v650
    %v987 = vpack.c.bf16 %v655, %v651
    %v988 = vpack.c.bf16 %v656, %v652
    %v989 = vpack.c.bf16 %v657, %v653
    %v990 = vpack.c.bf16 %v662, %v658
    %v991 = vpack.c.bf16 %v663, %v659
    %v992 = vpack.c.bf16 %v664, %v660
    %v993 = vpack.c.bf16 %v665, %v661
    %994 = vst [vmem:[#allocation2 + $0x100] sm:$0xff] %v986
    %995 = vst [vmem:[#allocation2 + $0x108] sm:$0xff] %v987
    %996 = vst [vmem:[#allocation2 + $0x110] sm:$0xff] %v988
    %997 = vst [vmem:[#allocation2 + $0x118] sm:$0xff] %v989
    %998 = vst [vmem:[#allocation2 + $0x120] sm:$0xff] %v990
    %999 = vst [vmem:[#allocation2 + $0x128] sm:$0xff] %v991
    %1000 = vst [vmem:[#allocation2 + $0x130] sm:$0xff] %v992
    %1001 = vst [vmem:[#allocation2 + $0x138] sm:$0xff] %v993
    %1002 = vrot.lane.b32.xlu0 %v650, 127
    %v1003 = vpop.permute.xlu0 %1002
    %1004 = vrot.lane.b32.xlu0 %v654, 127
    %v1005 = vpop.permute.xlu0 %1004
    %1006 = vrot.lane.b32.xlu0 %v658, 127
    %v1007 = vpop.permute.xlu0 %1006
    %1008 = vrot.lane.b32.xlu0 %v662, 127
    %v1009 = vpop.permute.xlu0 %1008
    %1010 = vrot.lane.b32.xlu0 %v651, 127
    %v1011 = vpop.permute.xlu0 %1010
    %1012 = vrot.lane.b32.xlu0 %v655, 127
    %v1013 = vpop.permute.xlu0 %1012
    %1014 = vrot.lane.b32.xlu0 %v659, 127
    %v1015 = vpop.permute.xlu0 %1014
    %1016 = vrot.lane.b32.xlu0 %v663, 127
    %v1017 = vpop.permute.xlu0 %1016
    %1018 = vrot.lane.b32.xlu0 %v652, 127
    %v1019 = vpop.permute.xlu0 %1018
    %1020 = vrot.lane.b32.xlu0 %v656, 127
    %v1021 = vpop.permute.xlu0 %1020
    %1022 = vrot.lane.b32.xlu0 %v660, 127
    %v1023 = vpop.permute.xlu0 %1022
    %1024 = vrot.lane.b32.xlu0 %v664, 127
    %v1025 = vpop.permute.xlu0 %1024
    %1026 = vrot.lane.b32.xlu0 %v653, 127
    %v1027 = vpop.permute.xlu0 %1026
    %1028 = vrot.lane.b32.xlu0 %v657, 127
    %v1029 = vpop.permute.xlu0 %1028
    %1030 = vrot.lane.b32.xlu0 %v661, 127
    %v1031 = vpop.permute.xlu0 %1030
    %1032 = vrot.lane.b32.xlu0 %v665, 127
    %v1033 = vpop.permute.xlu0 %1032
    %v1034 = vsel %vm286, %v1019, %v1027
    %v1035 = vsel %vm286, %v1021, %v1029
    %v1036 = vsel %vm286, %v1023, %v1031
    %v1037 = vsel %vm286, %v1025, %v1033
    %v1038 = vsel %vm286, %v1011, %v1019
    %v1039 = vsel %vm286, %v1013, %v1021
    %v1040 = vsel %vm286, %v1015, %v1023
    %v1041 = vsel %vm286, %v1017, %v1025
    %v1042 = vsel %vm286, %v1003, %v1011
    %v1043 = vsel %vm286, %v1005, %v1013
    %v1044 = vsel %vm286, %v1007, %v1015
    %v1045 = vsel %vm286, %v1009, %v1017
    %v1046 = vsel %vm286, %v1027, %v1003
    %v1047 = vsel %vm286, %v1029, %v1005
    %v1048 = vsel %vm286, %v1031, %v1007
    %v1049 = vsel %vm286, %v1033, %v1009
    %v1050 = vmul.f32 %v1042, %v294
    %v1051 = vmul.f32 %v1038, %v298
    %v1052 = vmul.f32 %v1034, %v302
    %v1053 = vmul.f32 %v1046, %v306
    %v1054 = vmul.f32 %v1043, %v294
    %v1055 = vmul.f32 %v1039, %v298
    %v1056 = vmul.f32 %v1035, %v302
    %v1057 = vmul.f32 %v1047, %v306
    %v1058 = vmul.f32 %v1044, %v294
    %v1059 = vmul.f32 %v1040, %v298
    %v1060 = vmul.f32 %v1036, %v302
    %v1061 = vmul.f32 %v1048, %v306
    %v1062 = vmul.f32 %v1045, %v294
    %v1063 = vmul.f32 %v1041, %v298
    %v1064 = vmul.f32 %v1037, %v302
    %v1065 = vmul.f32 %v1049, %v306
    %v1066 = vpack.c.bf16 %v1054, %v1050
    %v1067 = vpack.c.bf16 %v1055, %v1051
    %v1068 = vpack.c.bf16 %v1056, %v1052
    %v1069 = vpack.c.bf16 %v1057, %v1053
    %v1070 = vpack.c.bf16 %v1062, %v1058
    %v1071 = vpack.c.bf16 %v1063, %v1059
    %v1072 = vpack.c.bf16 %v1064, %v1060
    %v1073 = vpack.c.bf16 %v1065, %v1061
    %1074 = vst [vmem:[#allocation2 + $0x140] sm:$0xff] %v1066
    %1075 = vst [vmem:[#allocation2 + $0x148] sm:$0xff] %v1067
    %1076 = vst [vmem:[#allocation2 + $0x150] sm:$0xff] %v1068
    %1077 = vst [vmem:[#allocation2 + $0x158] sm:$0xff] %v1069
    %1078 = vst [vmem:[#allocation2 + $0x160] sm:$0xff] %v1070
    %1079 = vst [vmem:[#allocation2 + $0x168] sm:$0xff] %v1071
    %1080 = vst [vmem:[#allocation2 + $0x170] sm:$0xff] %v1072
    %1081 = vst [vmem:[#allocation2 + $0x178] sm:$0xff] %v1073
    %1082 = vrot.lane.b32.xlu0 %v650, 113
    %v1083 = vpop.permute.xlu0 %1082
    %1084 = vrot.lane.b32.xlu0 %v654, 113
    %v1085 = vpop.permute.xlu0 %1084
    %1086 = vrot.lane.b32.xlu0 %v658, 113
    %v1087 = vpop.permute.xlu0 %1086
    %1088 = vrot.lane.b32.xlu0 %v662, 113
    %v1089 = vpop.permute.xlu0 %1088
    %1090 = vrot.lane.b32.xlu0 %v651, 113
    %v1091 = vpop.permute.xlu0 %1090
    %1092 = vrot.lane.b32.xlu0 %v655, 113
    %v1093 = vpop.permute.xlu0 %1092
    %1094 = vrot.lane.b32.xlu0 %v659, 113
    %v1095 = vpop.permute.xlu0 %1094
    %1096 = vrot.lane.b32.xlu0 %v663, 113
    %v1097 = vpop.permute.xlu0 %1096
    %1098 = vrot.lane.b32.xlu0 %v652, 113
    %v1099 = vpop.permute.xlu0 %1098
    %1100 = vrot.lane.b32.xlu0 %v656, 113
    %v1101 = vpop.permute.xlu0 %1100
    %1102 = vrot.lane.b32.xlu0 %v660, 113
    %v1103 = vpop.permute.xlu0 %1102
    %1104 = vrot.lane.b32.xlu0 %v664, 113
    %v1105 = vpop.permute.xlu0 %1104
    %1106 = vrot.lane.b32.xlu0 %v653, 113
    %v1107 = vpop.permute.xlu0 %1106
    %1108 = vrot.lane.b32.xlu0 %v657, 113
    %v1109 = vpop.permute.xlu0 %1108
    %1110 = vrot.lane.b32.xlu0 %v661, 113
    %v1111 = vpop.permute.xlu0 %1110
    %1112 = vrot.lane.b32.xlu0 %v665, 113
    %v1113 = vpop.permute.xlu0 %1112
    %v1114 = vsel %vm339, %v1099, %v1107
    %v1115 = vsel %vm339, %v1101, %v1109
    %v1116 = vsel %vm339, %v1103, %v1111
    %v1117 = vsel %vm339, %v1105, %v1113
    %v1118 = vsel %vm339, %v1091, %v1099
    %v1119 = vsel %vm339, %v1093, %v1101
    %v1120 = vsel %vm339, %v1095, %v1103
    %v1121 = vsel %vm339, %v1097, %v1105
    %v1122 = vsel %vm339, %v1083, %v1091
    %v1123 = vsel %vm339, %v1085, %v1093
    %v1124 = vsel %vm339, %v1087, %v1095
    %v1125 = vsel %vm339, %v1089, %v1097
    %v1126 = vsel %vm339, %v1107, %v1083
    %v1127 = vsel %vm339, %v1109, %v1085
    %v1128 = vsel %vm339, %v1111, %v1087
    %v1129 = vsel %vm339, %v1113, %v1089
    %v1130 = vmul.f32 %v1122, %v347
    %v1131 = vmul.f32 %v1118, %v351
    %v1132 = vmul.f32 %v1114, %v355
    %v1133 = vmul.f32 %v1126, %v359
    %v1134 = vmul.f32 %v1123, %v347
    %v1135 = vmul.f32 %v1119, %v351
    %v1136 = vmul.f32 %v1115, %v355
    %v1137 = vmul.f32 %v1127, %v359
    %v1138 = vmul.f32 %v1124, %v347
    %v1139 = vmul.f32 %v1120, %v351
    %v1140 = vmul.f32 %v1116, %v355
    %v1141 = vmul.f32 %v1128, %v359
    %v1142 = vmul.f32 %v1125, %v347
    %v1143 = vmul.f32 %v1121, %v351
    %v1144 = vmul.f32 %v1117, %v355
    %v1145 = vmul.f32 %v1129, %v359
    %v1146 = vpack.c.bf16 %v1134, %v1130
    %v1147 = vpack.c.bf16 %v1135, %v1131
    %v1148 = vpack.c.bf16 %v1136, %v1132
    %v1149 = vpack.c.bf16 %v1137, %v1133
    %v1150 = vpack.c.bf16 %v1142, %v1138
    %v1151 = vpack.c.bf16 %v1143, %v1139
    %v1152 = vpack.c.bf16 %v1144, %v1140
    %v1153 = vpack.c.bf16 %v1145, %v1141
    %1154 = vst [vmem:[#allocation2 + $0x180] sm:$0xff] %v1146
    %1155 = vst [vmem:[#allocation2 + $0x188] sm:$0xff] %v1147
    %1156 = vst [vmem:[#allocation2 + $0x190] sm:$0xff] %v1148
    %1157 = vst [vmem:[#allocation2 + $0x198] sm:$0xff] %v1149
    %1158 = vst [vmem:[#allocation2 + $0x1a0] sm:$0xff] %v1150
    %1159 = vst [vmem:[#allocation2 + $0x1a8] sm:$0xff] %v1151
    %1160 = vst [vmem:[#allocation2 + $0x1b0] sm:$0xff] %v1152
    %1161 = vst [vmem:[#allocation2 + $0x1b8] sm:$0xff] %v1153
    %1162 = vrot.lane.b32.xlu0 %v650, 112
    %v1163 = vpop.permute.xlu0 %1162
    %1164 = vrot.lane.b32.xlu0 %v654, 112
    %v1165 = vpop.permute.xlu0 %1164
    %1166 = vrot.lane.b32.xlu0 %v658, 112
    %v1167 = vpop.permute.xlu0 %1166
    %1168 = vrot.lane.b32.xlu0 %v662, 112
    %v1169 = vpop.permute.xlu0 %1168
    %1170 = vrot.lane.b32.xlu0 %v651, 112
    %v1171 = vpop.permute.xlu0 %1170
    %1172 = vrot.lane.b32.xlu0 %v655, 112
    %v1173 = vpop.permute.xlu0 %1172
    %1174 = vrot.lane.b32.xlu0 %v659, 112
    %v1175 = vpop.permute.xlu0 %1174
    %1176 = vrot.lane.b32.xlu0 %v663, 112
    %v1177 = vpop.permute.xlu0 %1176
    %1178 = vrot.lane.b32.xlu0 %v652, 112
    %v1179 = vpop.permute.xlu0 %1178
    %1180 = vrot.lane.b32.xlu0 %v656, 112
    %v1181 = vpop.permute.xlu0 %1180
    %1182 = vrot.lane.b32.xlu0 %v660, 112
    %v1183 = vpop.permute.xlu0 %1182
    %1184 = vrot.lane.b32.xlu0 %v664, 112
    %v1185 = vpop.permute.xlu0 %1184
    %1186 = vrot.lane.b32.xlu0 %v653, 112
    %v1187 = vpop.permute.xlu0 %1186
    %1188 = vrot.lane.b32.xlu0 %v657, 112
    %v1189 = vpop.permute.xlu0 %1188
    %1190 = vrot.lane.b32.xlu0 %v661, 112
    %v1191 = vpop.permute.xlu0 %1190
    %1192 = vrot.lane.b32.xlu0 %v665, 112
    %v1193 = vpop.permute.xlu0 %1192
    %v1194 = vsel %vm380, %v1179, %v1187
    %v1195 = vsel %vm380, %v1181, %v1189
    %v1196 = vsel %vm380, %v1183, %v1191
    %v1197 = vsel %vm380, %v1185, %v1193
    %v1198 = vsel %vm380, %v1171, %v1179
    %v1199 = vsel %vm380, %v1173, %v1181
    %v1200 = vsel %vm380, %v1175, %v1183
    %v1201 = vsel %vm380, %v1177, %v1185
    %v1202 = vsel %vm380, %v1163, %v1171
    %v1203 = vsel %vm380, %v1165, %v1173
    %v1204 = vsel %vm380, %v1167, %v1175
    %v1205 = vsel %vm380, %v1169, %v1177
    %v1206 = vsel %vm380, %v1187, %v1163
    %v1207 = vsel %vm380, %v1189, %v1165
    %v1208 = vsel %vm380, %v1191, %v1167
    %v1209 = vsel %vm380, %v1193, %v1169
    %v1210 = vmul.f32 %v1202, %v388
    %v1211 = vmul.f32 %v1198, %v392
    %v1212 = vmul.f32 %v1194, %v396
    %v1213 = vmul.f32 %v1206, %v400
    %v1214 = vmul.f32 %v1203, %v388
    %v1215 = vmul.f32 %v1199, %v392
    %v1216 = vmul.f32 %v1195, %v396
    %v1217 = vmul.f32 %v1207, %v400
    %v1218 = vmul.f32 %v1204, %v388
    %v1219 = vmul.f32 %v1200, %v392
    %v1220 = vmul.f32 %v1196, %v396
    %v1221 = vmul.f32 %v1208, %v400
    %v1222 = vmul.f32 %v1205, %v388
    %v1223 = vmul.f32 %v1201, %v392
    %v1224 = vmul.f32 %v1197, %v396
    %v1225 = vmul.f32 %v1209, %v400
    %v1226 = vpack.c.bf16 %v1214, %v1210
    %v1227 = vpack.c.bf16 %v1215, %v1211
    %v1228 = vpack.c.bf16 %v1216, %v1212
    %v1229 = vpack.c.bf16 %v1217, %v1213
    %v1230 = vpack.c.bf16 %v1222, %v1218
    %v1231 = vpack.c.bf16 %v1223, %v1219
    %v1232 = vpack.c.bf16 %v1224, %v1220
    %v1233 = vpack.c.bf16 %v1225, %v1221
    %1234 = vst [vmem:[#allocation2 + $0x1c0] sm:$0xff] %v1226
    %1235 = vst [vmem:[#allocation2 + $0x1c8] sm:$0xff] %v1227
    %1236 = vst [vmem:[#allocation2 + $0x1d0] sm:$0xff] %v1228
    %1237 = vst [vmem:[#allocation2 + $0x1d8] sm:$0xff] %v1229
    %1238 = vst [vmem:[#allocation2 + $0x1e0] sm:$0xff] %v1230
    %1239 = vst [vmem:[#allocation2 + $0x1e8] sm:$0xff] %v1231
    %1240 = vst [vmem:[#allocation2 + $0x1f0] sm:$0xff] %v1232
    %1241 = vst [vmem:[#allocation2 + $0x1f8] sm:$0xff] %v1233
    %1242 = vrot.lane.b32.xlu0 %v650, 111
    %v1243 = vpop.permute.xlu0 %1242
    %1244 = vrot.lane.b32.xlu0 %v654, 111
    %v1245 = vpop.permute.xlu0 %1244
    %1246 = vrot.lane.b32.xlu0 %v658, 111
    %v1247 = vpop.permute.xlu0 %1246
    %1248 = vrot.lane.b32.xlu0 %v662, 111
    %v1249 = vpop.permute.xlu0 %1248
    %1250 = vrot.lane.b32.xlu0 %v651, 111
    %v1251 = vpop.permute.xlu0 %1250
    %1252 = vrot.lane.b32.xlu0 %v655, 111
    %v1253 = vpop.permute.xlu0 %1252
    %1254 = vrot.lane.b32.xlu0 %v659, 111
    %v1255 = vpop.permute.xlu0 %1254
    %1256 = vrot.lane.b32.xlu0 %v663, 111
    %v1257 = vpop.permute.xlu0 %1256
    %1258 = vrot.lane.b32.xlu0 %v652, 111
    %v1259 = vpop.permute.xlu0 %1258
    %1260 = vrot.lane.b32.xlu0 %v656, 111
    %v1261 = vpop.permute.xlu0 %1260
    %1262 = vrot.lane.b32.xlu0 %v660, 111
    %v1263 = vpop.permute.xlu0 %1262
    %1264 = vrot.lane.b32.xlu0 %v664, 111
    %v1265 = vpop.permute.xlu0 %1264
    %1266 = vrot.lane.b32.xlu0 %v653, 111
    %v1267 = vpop.permute.xlu0 %1266
    %1268 = vrot.lane.b32.xlu0 %v657, 111
    %v1269 = vpop.permute.xlu0 %1268
    %1270 = vrot.lane.b32.xlu0 %v661, 111
    %v1271 = vpop.permute.xlu0 %1270
    %1272 = vrot.lane.b32.xlu0 %v665, 111
    %v1273 = vpop.permute.xlu0 %1272
    %v1274 = vsel %vm433, %v1259, %v1267
    %v1275 = vsel %vm433, %v1261, %v1269
    %v1276 = vsel %vm433, %v1263, %v1271
    %v1277 = vsel %vm433, %v1265, %v1273
    %v1278 = vsel %vm433, %v1251, %v1259
    %v1279 = vsel %vm433, %v1253, %v1261
    %v1280 = vsel %vm433, %v1255, %v1263
    %v1281 = vsel %vm433, %v1257, %v1265
    %v1282 = vsel %vm433, %v1243, %v1251
    %v1283 = vsel %vm433, %v1245, %v1253
    %v1284 = vsel %vm433, %v1247, %v1255
    %v1285 = vsel %vm433, %v1249, %v1257
    %v1286 = vsel %vm433, %v1267, %v1243
    %v1287 = vsel %vm433, %v1269, %v1245
    %v1288 = vsel %vm433, %v1271, %v1247
    %v1289 = vsel %vm433, %v1273, %v1249
    %v1290 = vmul.f32 %v1282, %v441
    %v1291 = vmul.f32 %v1278, %v445
    %v1292 = vmul.f32 %v1274, %v449
    %v1293 = vmul.f32 %v1286, %v453
    %v1294 = vmul.f32 %v1283, %v441
    %v1295 = vmul.f32 %v1279, %v445
    %v1296 = vmul.f32 %v1275, %v449
    %v1297 = vmul.f32 %v1287, %v453
    %v1298 = vmul.f32 %v1284, %v441
    %v1299 = vmul.f32 %v1280, %v445
    %v1300 = vmul.f32 %v1276, %v449
    %v1301 = vmul.f32 %v1288, %v453
    %v1302 = vmul.f32 %v1285, %v441
    %v1303 = vmul.f32 %v1281, %v445
    %v1304 = vmul.f32 %v1277, %v449
    %v1305 = vmul.f32 %v1289, %v453
    %v1306 = vpack.c.bf16 %v1294, %v1290
    %v1307 = vpack.c.bf16 %v1295, %v1291
    %v1308 = vpack.c.bf16 %v1296, %v1292
    %v1309 = vpack.c.bf16 %v1297, %v1293
    %v1310 = vpack.c.bf16 %v1302, %v1298
    %v1311 = vpack.c.bf16 %v1303, %v1299
    %v1312 = vpack.c.bf16 %v1304, %v1300
    %v1313 = vpack.c.bf16 %v1305, %v1301
    %1314 = vst [vmem:[#allocation2 + $0x200] sm:$0xff] %v1306
    %1315 = vst [vmem:[#allocation2 + $0x208] sm:$0xff] %v1307
    %1316 = vst [vmem:[#allocation2 + $0x210] sm:$0xff] %v1308
    %1317 = vst [vmem:[#allocation2 + $0x218] sm:$0xff] %v1309
    %1318 = vst [vmem:[#allocation2 + $0x220] sm:$0xff] %v1310
    %1319 = vst [vmem:[#allocation2 + $0x228] sm:$0xff] %v1311
    %1320 = vst [vmem:[#allocation2 + $0x230] sm:$0xff] %v1312
    %1321 = vst [vmem:[#allocation2 + $0x238] sm:$0xff] %v1313
    %v1322 = vld [vmem:[%s6] sm:$0xff]
    %v1323 = vld [vmem:[%s6 + $0x8] sm:$0xf]
    %v1324 = vld [vmem:[#allocation2] sm:$0xff]
    %v1325 = vld [vmem:[#allocation2 + $0x8] sm:$0xff]
    %v1326 = vld [vmem:[#allocation2 + $0x10] sm:$0xff]
    %v1327 = vld [vmem:[#allocation2 + $0x18] sm:$0xff]
    %v1328 = vld [vmem:[#allocation2 + $0x20] sm:$0xff]
    %v1329 = vld [vmem:[#allocation2 + $0x28] sm:$0xff]
    %v1330 = vld [vmem:[#allocation2 + $0x30] sm:$0xff]
    %v1331 = vld [vmem:[#allocation2 + $0x38] sm:$0xff]
    %v1332 = vld [vmem:[#allocation2 + $0x40] sm:$0xff]
    %v1333 = vld [vmem:[#allocation2 + $0x48] sm:$0xff]
    %v1334 = vld [vmem:[#allocation2 + $0x50] sm:$0xff]
    %v1335 = vld [vmem:[#allocation2 + $0x58] sm:$0xff]
    %v1336 = vld [vmem:[#allocation2 + $0x60] sm:$0xff]
    %v1337 = vld [vmem:[#allocation2 + $0x68] sm:$0xff]
    %v1338 = vld [vmem:[#allocation2 + $0x70] sm:$0xff]
    %v1339 = vld [vmem:[#allocation2 + $0x78] sm:$0xff]
    %v1340 = vld [vmem:[#allocation2 + $0x80] sm:$0xff]
    %v1341 = vld [vmem:[#allocation2 + $0x88] sm:$0xff]
    %v1342 = vld [vmem:[#allocation2 + $0x90] sm:$0xff]
    %v1343 = vld [vmem:[#allocation2 + $0x98] sm:$0xff]
    %v1344 = vld [vmem:[#allocation2 + $0xa0] sm:$0xff]
    %v1345 = vld [vmem:[#allocation2 + $0xa8] sm:$0xff]
    %v1346 = vld [vmem:[#allocation2 + $0xb0] sm:$0xff]
    %v1347 = vld [vmem:[#allocation2 + $0xb8] sm:$0xff]
    %v1348 = vld [vmem:[#allocation2 + $0xc0] sm:$0xff]
    %v1349 = vld [vmem:[#allocation2 + $0xc8] sm:$0xff]
    %v1350 = vld [vmem:[#allocation2 + $0xd0] sm:$0xff]
    %v1351 = vld [vmem:[#allocation2 + $0xd8] sm:$0xff]
    %v1352 = vld [vmem:[#allocation2 + $0xe0] sm:$0xff]
    %v1353 = vld [vmem:[#allocation2 + $0xe8] sm:$0xff]
    %v1354 = vld [vmem:[#allocation2 + $0xf0] sm:$0xff]
    %v1355 = vld [vmem:[#allocation2 + $0xf8] sm:$0xff]
    %v1356 = vld [vmem:[#allocation2 + $0x100] sm:$0xff]
    %v1357 = vld [vmem:[#allocation2 + $0x108] sm:$0xff]
    %v1358 = vld [vmem:[#allocation2 + $0x110] sm:$0xff]
    %v1359 = vld [vmem:[#allocation2 + $0x118] sm:$0xff]
    %v1360 = vld [vmem:[#allocation2 + $0x120] sm:$0xff]
    %v1361 = vld [vmem:[#allocation2 + $0x128] sm:$0xff]
    %v1362 = vld [vmem:[#allocation2 + $0x130] sm:$0xff]
    %v1363 = vld [vmem:[#allocation2 + $0x138] sm:$0xff]
    %v1364 = vld [vmem:[#allocation2 + $0x140] sm:$0xff]
    %v1365 = vld [vmem:[#allocation2 + $0x148] sm:$0xff]
    %v1366 = vld [vmem:[#allocation2 + $0x150] sm:$0xff]
    %v1367 = vld [vmem:[#allocation2 + $0x158] sm:$0xff]
    %v1368 = vld [vmem:[#allocation2 + $0x160] sm:$0xff]
    %v1369 = vld [vmem:[#allocation2 + $0x168] sm:$0xff]
    %v1370 = vld [vmem:[#allocation2 + $0x170] sm:$0xff]
    %v1371 = vld [vmem:[#allocation2 + $0x178] sm:$0xff]
    %v1372 = vld [vmem:[#allocation2 + $0x180] sm:$0xff]
    %v1373 = vld [vmem:[#allocation2 + $0x188] sm:$0xff]
    %v1374 = vld [vmem:[#allocation2 + $0x190] sm:$0xff]
    %v1375 = vld [vmem:[#allocation2 + $0x198] sm:$0xff]
    %v1376 = vld [vmem:[#allocation2 + $0x1a0] sm:$0xff]
    %v1377 = vld [vmem:[#allocation2 + $0x1a8] sm:$0xff]
    %v1378 = vld [vmem:[#allocation2 + $0x1b0] sm:$0xff]
    %v1379 = vld [vmem:[#allocation2 + $0x1b8] sm:$0xff]
    %v1380 = vld [vmem:[#allocation2 + $0x1c0] sm:$0xff]
    %v1381 = vld [vmem:[#allocation2 + $0x1c8] sm:$0xff]
    %v1382 = vld [vmem:[#allocation2 + $0x1d0] sm:$0xff]
    %v1383 = vld [vmem:[#allocation2 + $0x1d8] sm:$0xff]
    %v1384 = vld [vmem:[#allocation2 + $0x1e0] sm:$0xff]
    %v1385 = vld [vmem:[#allocation2 + $0x1e8] sm:$0xff]
    %v1386 = vld [vmem:[#allocation2 + $0x1f0] sm:$0xff]
    %v1387 = vld [vmem:[#allocation2 + $0x1f8] sm:$0xff]
    %v1388 = vld [vmem:[#allocation2 + $0x200] sm:$0xff]
    %v1389 = vld [vmem:[#allocation2 + $0x208] sm:$0xff]
    %v1390 = vld [vmem:[#allocation2 + $0x210] sm:$0xff]
    %v1391 = vld [vmem:[#allocation2 + $0x218] sm:$0xff]
    %v1392 = vld [vmem:[#allocation2 + $0x220] sm:$0xff]
    %v1393 = vld [vmem:[#allocation2 + $0x228] sm:$0xff]
    %v1394 = vld [vmem:[#allocation2 + $0x230] sm:$0xff]
    %v1395 = vld [vmem:[#allocation2 + $0x238] sm:$0xff]
    %v1396 = vld [vmem:[%s7] sm:$0xff]
    %1398 = vset.pattern.permute.xlu0 0
    %1399 = vperm.xlu0 %1398, %v1396
    %v1400 = vpop.permute.xlu0 %1399
    %v1404 = vunpack.c.l.b16 %v1322
    %v1405 = vunpack.c.h.b16 %v1322
    %v1406 = vunpack.c.l.b16 %v1323
    %v1407 = vpack.c.b16 %v1404, %v1404
    %v1408 = vpack.c.b16 %v1405, %v1405
    %v1409 = vpack.c.b16 %v1406, %v1406
    %vm1412 = vcmask 261120
    %v1414 = vsel %vm1412, %v1409, 0
    %1416 = vmatprep.subr.bf16.mxu0 %v1325
    %1417 = vmatpush1.bf16.msra.mxu0 %v1324
    %1418 = vmatprep.subr.bf16.mxu0 %v1329
    %1419 = vmatpush1.bf16.msra.mxu0 %v1328
    %1420 = vmatprep.subr.bf16.mxu0 %v1333
    %1421 = vmatpush1.bf16.msra.mxu0 %v1332
    %1422 = vmatprep.subr.bf16.mxu0 %v1337
    %1423 = vmatpush1.bf16.msra.mxu0 %v1336
    %1424 = vmatprep.subr.bf16.mxu0 %v1341
    %1425 = vmatpush1.bf16.msra.mxu0 %v1340
    %1426 = vmatprep.subr.bf16.mxu0 %v1345
    %1427 = vmatpush1.bf16.msra.mxu0 %v1344
    %1428 = vmatprep.subr.bf16.mxu0 %v1349
    %1429 = vmatpush1.bf16.msra.mxu0 %v1348
    %1430 = vmatprep.subr.bf16.mxu0 %v1353
    %1431 = vmatpush1.bf16.msra.mxu0 %v1352
    %1432 = vmatprep.subr.bf16.mxu0 %v1357
    %1433 = vmatpush1.bf16.msra.mxu0 %v1356
    %1434 = vmatprep.subr.bf16.mxu0 %v1361
    %1435 = vmatpush1.bf16.msra.mxu0 %v1360
    %1436 = vmatprep.subr.bf16.mxu0 %v1365
    %1437 = vmatpush1.bf16.msra.mxu0 %v1364
    %1438 = vmatprep.subr.bf16.mxu0 %v1369
    %1439 = vmatpush1.bf16.msra.mxu0 %v1368
    %1440 = vmatprep.subr.bf16.mxu0 %v1373
    %1441 = vmatpush1.bf16.msra.mxu0 %v1372
    %1442 = vmatprep.subr.bf16.mxu0 %v1377
    %1443 = vmatpush1.bf16.msra.mxu0 %v1376
    %1444 = vmatprep.subr.bf16.mxu0 %v1381
    %1445 = vmatpush1.bf16.msra.mxu0 %v1380
    %1446 = vmatprep.subr.bf16.mxu0 %v1385
    %1447 = vmatpush1.bf16.msra.mxu0 %v1384
    %1448 = vmatprep.mubr.bf16.mxu0 %v1408
    %1449 = vmatmul.mubr.bf16.gmra.mrb[0].mxu0 %v1407
    %v1450 = vpop.f32.mrb[0].mxu0
    %v1451 = vadd.f32 %v1400, %v1450
    %v1452 = vpop.f32.mrb[0].mxu0
    %v1453 = vadd.f32 %v1400, %v1452
    %v1454 = vpop.f32.mrb[0].mxu0
    %v1455 = vpop.f32.mrb[0].mxu0
    %1456 = vdwg.mxu0
    %1457 = vmatprep.subr.bf16.mxu0 %v1389
    %1458 = vmatpush1.bf16.msra.mxu0 %v1388
    %1459 = vmatprep.subr.bf16.mxu0 %v1393
    %1460 = vmatpush1.bf16.msra.mxu0 %v1392
    %1461 = vmatprep.subr.bf16.mxu0 0
    %1462 = vmatpush1.bf16.msra.mxu0 0
    %1463 = vmatprep.subr.bf16.mxu0 0
    %1464 = vmatpush1.bf16.msra.mxu0 0
    %1465 = vmatprep.subr.bf16.mxu0 0
    %1466 = vmatpush1.bf16.msra.mxu0 0
    %1467 = vmatprep.subr.bf16.mxu0 0
    %1468 = vmatpush1.bf16.msra.mxu0 0
    %1469 = vmatprep.subr.bf16.mxu0 0
    %1470 = vmatpush1.bf16.msra.mxu0 0
    %1471 = vmatprep.subr.bf16.mxu0 0
    %1472 = vmatpush1.bf16.msra.mxu0 0
    %1473 = vmatprep.subr.bf16.mxu0 0
    %1474 = vmatpush1.bf16.msra.mxu0 0
    %1475 = vmatprep.subr.bf16.mxu0 0
    %1476 = vmatpush1.bf16.msra.mxu0 0
    %1477 = vmatprep.subr.bf16.mxu0 0
    %1478 = vmatpush1.bf16.msra.mxu0 0
    %1479 = vmatprep.subr.bf16.mxu0 0
    %1480 = vmatpush1.bf16.msra.mxu0 0
    %1481 = vmatprep.subr.bf16.mxu0 0
    %1482 = vmatpush1.bf16.msra.mxu0 0
    %1483 = vmatprep.subr.bf16.mxu0 0
    %1484 = vmatpush1.bf16.msra.mxu0 0
    %1485 = vmatprep.subr.bf16.mxu0 0
    %1486 = vmatpush1.bf16.msra.mxu0 0
    %1487 = vmatprep.subr.bf16.mxu0 0
    %1488 = vmatpush1.bf16.msra.mxu0 0
    %1489 = vmatprep.mubr.bf16.mxu0 0
    %1490 = vmatmul.mubr.bf16.gmra.mrb[0].mxu0 %v1414
    %v1491 = vpop.f32.mrb[0].mxu0
    %v1492 = vadd.f32 %v1451, %v1491
    %v1493 = vpop.f32.mrb[0].mxu0
    %v1494 = vadd.f32 %v1453, %v1493
    %v1495 = vpop.f32.mrb[0].mxu0
    %v1496 = vpop.f32.mrb[0].mxu0
    %1497 = vdwg.mxu0
    %1498 = vmatprep.subr.bf16.mxu0 %v1327
    %1499 = vmatpush1.bf16.msra.mxu0 %v1326
    %1500 = vmatprep.subr.bf16.mxu0 %v1331
    %1501 = vmatpush1.bf16.msra.mxu0 %v1330
    %1502 = vmatprep.subr.bf16.mxu0 %v1335
    %1503 = vmatpush1.bf16.msra.mxu0 %v1334
    %1504 = vmatprep.subr.bf16.mxu0 %v1339
    %1505 = vmatpush1.bf16.msra.mxu0 %v1338
    %1506 = vmatprep.subr.bf16.mxu0 %v1343
    %1507 = vmatpush1.bf16.msra.mxu0 %v1342
    %1508 = vmatprep.subr.bf16.mxu0 %v1347
    %1509 = vmatpush1.bf16.msra.mxu0 %v1346
    %1510 = vmatprep.subr.bf16.mxu0 %v1351
    %1511 = vmatpush1.bf16.msra.mxu0 %v1350
    %1512 = vmatprep.subr.bf16.mxu0 %v1355
    %1513 = vmatpush1.bf16.msra.mxu0 %v1354
    %1514 = vmatprep.subr.bf16.mxu0 %v1359
    %1515 = vmatpush1.bf16.msra.mxu0 %v1358
    %1516 = vmatprep.subr.bf16.mxu0 %v1363
    %1517 = vmatpush1.bf16.msra.mxu0 %v1362
    %1518 = vmatprep.subr.bf16.mxu0 %v1367
    %1519 = vmatpush1.bf16.msra.mxu0 %v1366
    %1520 = vmatprep.subr.bf16.mxu0 %v1371
    %1521 = vmatpush1.bf16.msra.mxu0 %v1370
    %1522 = vmatprep.subr.bf16.mxu0 %v1375
    %1523 = vmatpush1.bf16.msra.mxu0 %v1374
    %1524 = vmatprep.subr.bf16.mxu0 %v1379
    %1525 = vmatpush1.bf16.msra.mxu0 %v1378
    %1526 = vmatprep.subr.bf16.mxu0 %v1383
    %1527 = vmatpush1.bf16.msra.mxu0 %v1382
    %1528 = vmatprep.subr.bf16.mxu0 %v1387
    %1529 = vmatpush1.bf16.msra.mxu0 %v1386
    %1530 = vmatprep.mubr.bf16.mxu0 %v1408
    %1531 = vmatmul.mubr.bf16.gmra.mrb[0].mxu0 %v1407
    %v1532 = vpop.f32.mrb[0].mxu0
    %v1533 = vadd.f32 %v1400, %v1532
    %v1534 = vpop.f32.mrb[0].mxu0
    %v1535 = vadd.f32 %v1400, %v1534
    %v1536 = vpop.f32.mrb[0].mxu0
    %v1537 = vpop.f32.mrb[0].mxu0
    %1538 = vdwg.mxu0
    %1539 = vmatprep.subr.bf16.mxu0 %v1391
    %1540 = vmatpush1.bf16.msra.mxu0 %v1390
    %1541 = vmatprep.subr.bf16.mxu0 %v1395
    %1542 = vmatpush1.bf16.msra.mxu0 %v1394
    %1543 = vmatprep.subr.bf16.mxu0 0
    %1544 = vmatpush1.bf16.msra.mxu0 0
    %1545 = vmatprep.subr.bf16.mxu0 0
    %1546 = vmatpush1.bf16.msra.mxu0 0
    %1547 = vmatprep.subr.bf16.mxu0 0
    %1548 = vmatpush1.bf16.msra.mxu0 0
    %1549 = vmatprep.subr.bf16.mxu0 0
    %1550 = vmatpush1.bf16.msra.mxu0 0
    %1551 = vmatprep.subr.bf16.mxu0 0
    %1552 = vmatpush1.bf16.msra.mxu0 0
    %1553 = vmatprep.subr.bf16.mxu0 0
    %1554 = vmatpush1.bf16.msra.mxu0 0
    %1555 = vmatprep.subr.bf16.mxu0 0
    %1556 = vmatpush1.bf16.msra.mxu0 0
    %1557 = vmatprep.subr.bf16.mxu0 0
    %1558 = vmatpush1.bf16.msra.mxu0 0
    %1559 = vmatprep.subr.bf16.mxu0 0
    %1560 = vmatpush1.bf16.msra.mxu0 0
    %1561 = vmatprep.subr.bf16.mxu0 0
    %1562 = vmatpush1.bf16.msra.mxu0 0
    %1563 = vmatprep.subr.bf16.mxu0 0
    %1564 = vmatpush1.bf16.msra.mxu0 0
    %1565 = vmatprep.subr.bf16.mxu0 0
    %1566 = vmatpush1.bf16.msra.mxu0 0
    %1567 = vmatprep.subr.bf16.mxu0 0
    %1568 = vmatpush1.bf16.msra.mxu0 0
    %1569 = vmatprep.subr.bf16.mxu0 0
    %1570 = vmatpush1.bf16.msra.mxu0 0
    %1571 = vmatprep.mubr.bf16.mxu0 0
    %1572 = vmatmul.mubr.bf16.gmra.mrb[0].mxu0 %v1414
    %v1573 = vpop.f32.mrb[0].mxu0
    %v1574 = vadd.f32 %v1533, %v1573
    %v1575 = vpop.f32.mrb[0].mxu0
    %v1576 = vadd.f32 %v1535, %v1575
    %v1577 = vpop.f32.mrb[0].mxu0
    %v1578 = vpop.f32.mrb[0].mxu0
    %1579 = vdwg.mxu0
    %v1580 = vxor.u32 %v1492, 2147483648
    %v1581 = vxor.u32 %v1494, 2147483648
    %v1582 = vxor.u32 %v1574, 2147483648
    %v1583 = vxor.u32 %v1576, 2147483648
    %v1584 = vmul.f32 %v1580, 1.442695
    %v1585 = vpow.pop %v1584
    %v1586 = vmul.f32 %v1581, 1.442695
    %v1587 = vpow.pop %v1586
    %v1588 = vmul.f32 %v1582, 1.442695
    %v1589 = vpow.pop %v1588
    %v1590 = vmul.f32 %v1583, 1.442695
    %v1591 = vpow.pop %v1590
    %v1592 = vadd.f32 %v1585, 1.0
    %v1593 = vadd.f32 %v1587, 1.0
    %v1594 = vadd.f32 %v1589, 1.0
    %v1595 = vadd.f32 %v1591, 1.0
    %v1596 = vrcp.pop %v1592
    %v1597 = vmul.f32 1.0, %v1596
    %v1598 = vrcp.pop %v1593
    %v1599 = vmul.f32 1.0, %v1598
    %v1600 = vrcp.pop %v1594
    %v1601 = vmul.f32 1.0, %v1600
    %v1602 = vrcp.pop %v1595
    %v1603 = vmul.f32 1.0, %v1602
    %v1604 = vld [vmem:[#allocation3] sm:$0xff]
    %v1605 = vld [vmem:[#allocation3 + $0x8] sm:$0xff]
    %v1606 = vld [vmem:[#allocation8] sm:$0xff]
    %v1608 = vlaneseq
    %v1609 = vshrl.u32 %v1608, 7
    %v1610 = vsub.s32 0, %v1609
    %v1611 = vrot.slane %v1606, %v1610
    %v1612 = vlaneseq
    %v1613 = vshrl.u32 %v1612, 7
    %v1614 = vsub.s32 2, %v1613
    %v1615 = vrot.slane %v1606, %v1614
    %v1616 = vlaneseq
    %v1617 = vshrl.u32 %v1616, 7
    %v1618 = vsub.s32 4, %v1617
    %v1619 = vrot.slane %v1606, %v1618
    %v1620 = vlaneseq
    %v1621 = vshrl.u32 %v1620, 7
    %v1622 = vsub.s32 6, %v1621
    %v1623 = vrot.slane %v1606, %v1622
    %v1628 = vlaneseq
    %v1629 = vshrl.u32 %v1628, 7
    %v1630 = vsub.s32 0, %v1629
    %v1631 = vrot.slane %v1611, %v1630
    %v1632 = vlaneseq
    %v1633 = vshrl.u32 %v1632, 7
    %v1634 = vsub.s32 0, %v1633
    %v1635 = vrot.slane %v1615, %v1634
    %v1636 = vlaneseq
    %v1637 = vshrl.u32 %v1636, 7
    %v1638 = vsub.s32 0, %v1637
    %v1639 = vrot.slane %v1619, %v1638
    %v1640 = vlaneseq
    %v1641 = vshrl.u32 %v1640, 7
    %v1642 = vsub.s32 0, %v1641
    %v1643 = vrot.slane %v1623, %v1642
    %v1648 = vcombine.low %v1631, %v1635
    %v1649 = vcombine.low %v1639, %v1643
    %v1652 = vmul.f32 %v1604, %v1648
    %v1653 = vmul.f32 %v1605, %v1649
    %v1656 = vcombine.high %v1652, %v1652
    %v1657 = vcombine.high %v1653, %v1653
    %v1660 = vsel %vm531, %v1652, 0.0
    %v1661 = vsel %vm531, %v1656, 0.0
    %v1662 = vadd.f32 %v1660, %v1661
    %v1663 = vsel %vm531, %v1653, 0.0
    %v1664 = vadd.f32 %v1662, %v1663
    %v1665 = vsel %vm531, %v1657, 0.0
    %v1666 = vadd.f32 %v1664, %v1665
    %1667 = vadd.xlane.f32.xlu0 %v1666
    %v1668 = vpop.xlane.xlu0 %1667
    %v1669 = vmul.f32 %v1668, 0.00390625
    %v1670 = vmul.f32 %v1669, %v1631
    %v1671 = vmul.f32 %v1669, %v1635
    %v1672 = vmul.f32 %v1669, %v1639
    %v1673 = vmul.f32 %v1669, %v1643
    %v1678 = vcombine.low %v1670, %v1671
    %v1679 = vcombine.low %v1672, %v1673
    %v1682 = vsub.f32 %v1652, %v1678
    %v1683 = vsub.f32 %v1653, %v1679
    %v1684 = vmul.f32 %v1682, %v1682
    %v1685 = vmul.f32 %v1683, %v1683
    %v1688 = vcombine.high %v1684, %v1684
    %v1689 = vcombine.high %v1685, %v1685
    %v1692 = vsel %vm531, %v1684, 0.0
    %v1693 = vsel %vm531, %v1688, 0.0
    %v1694 = vadd.f32 %v1692, %v1693
    %v1695 = vsel %vm531, %v1685, 0.0
    %v1696 = vadd.f32 %v1694, %v1695
    %v1697 = vsel %vm531, %v1689, 0.0
    %v1698 = vadd.f32 %v1696, %v1697
    %1699 = vadd.xlane.f32.xlu0 %v1698
    %v1700 = vpop.xlane.xlu0 %1699
    %v1701 = vmul.f32 %v1700, 0.00390625
    %v1702 = vadd.f32 %v1670, 0.0
    %v1703 = vadd.f32 %v1671, 0.0
    %v1704 = vadd.f32 %v1672, 0.0
    %v1705 = vadd.f32 %v1673, 0.0
    %v1706 = vadd.f32 %v1701, 1e-05
    %v1707 = vrsqrt.pop %v1706
    %v1708 = vmul.f32 %v1707, %v1631
    %v1709 = vmul.f32 %v1707, %v1635
    %v1710 = vmul.f32 %v1707, %v1639
    %v1711 = vmul.f32 %v1707, %v1643
    %v1712 = vadd.f32 %v1708, 0.0
    %v1713 = vadd.f32 %v1709, 0.0
    %v1714 = vadd.f32 %v1710, 0.0
    %v1715 = vadd.f32 %v1711, 0.0
    %v1716 = vlaneseq
    %v1717 = vshrl.u32 %v1716, 7
    %v1718 = vsub.s32 1, %v1717
    %v1719 = vrot.slane %v1606, %v1718
    %v1720 = vlaneseq
    %v1721 = vshrl.u32 %v1720, 7
    %v1722 = vsub.s32 3, %v1721
    %v1723 = vrot.slane %v1606, %v1722
    %v1724 = vlaneseq
    %v1725 = vshrl.u32 %v1724, 7
    %v1726 = vsub.s32 5, %v1725
    %v1727 = vrot.slane %v1606, %v1726
    %v1728 = vlaneseq
    %v1729 = vshrl.u32 %v1728, 7
    %v1730 = vsub.s32 7, %v1729
    %v1731 = vrot.slane %v1606, %v1730
    %v1736 = vlaneseq
    %v1737 = vshrl.u32 %v1736, 7
    %v1738 = vsub.s32 1, %v1737
    %v1739 = vrot.slane %v1719, %v1738
    %v1740 = vlaneseq
    %v1741 = vshrl.u32 %v1740, 7
    %v1742 = vsub.s32 1, %v1741
    %v1743 = vrot.slane %v1723, %v1742
    %v1744 = vlaneseq
    %v1745 = vshrl.u32 %v1744, 7
    %v1746 = vsub.s32 1, %v1745
    %v1747 = vrot.slane %v1727, %v1746
    %v1748 = vlaneseq
    %v1749 = vshrl.u32 %v1748, 7
    %v1750 = vsub.s32 1, %v1749
    %v1751 = vrot.slane %v1731, %v1750
    %v1756 = vcombine.low %v1739, %v1743
    %v1757 = vcombine.low %v1747, %v1751
    %v1760 = vmul.f32 %v1604, %v1756
    %v1761 = vmul.f32 %v1605, %v1757
    %v1764 = vcombine.high %v1760, %v1760
    %v1765 = vcombine.high %v1761, %v1761
    %v1768 = vsel %vm531, %v1760, 0.0
    %v1769 = vsel %vm531, %v1764, 0.0
    %v1770 = vadd.f32 %v1768, %v1769
    %v1771 = vsel %vm531, %v1761, 0.0
    %v1772 = vadd.f32 %v1770, %v1771
    %v1773 = vsel %vm531, %v1765, 0.0
    %v1774 = vadd.f32 %v1772, %v1773
    %1775 = vadd.xlane.f32.xlu0 %v1774
    %v1776 = vpop.xlane.xlu0 %1775
    %v1777 = vmul.f32 %v1776, 0.00390625
    %v1778 = vmul.f32 %v1777, %v1739
    %v1779 = vmul.f32 %v1777, %v1743
    %v1780 = vmul.f32 %v1777, %v1747
    %v1781 = vmul.f32 %v1777, %v1751
    %v1786 = vcombine.low %v1778, %v1779
    %v1787 = vcombine.low %v1780, %v1781
    %v1790 = vsub.f32 %v1760, %v1786
    %v1791 = vsub.f32 %v1761, %v1787
    %v1792 = vmul.f32 %v1790, %v1790
    %v1793 = vmul.f32 %v1791, %v1791
    %v1796 = vcombine.high %v1792, %v1792
    %v1797 = vcombine.high %v1793, %v1793
    %v1800 = vsel %vm531, %v1792, 0.0
    %v1801 = vsel %vm531, %v1796, 0.0
    %v1802 = vadd.f32 %v1800, %v1801
    %v1803 = vsel %vm531, %v1793, 0.0
    %v1804 = vadd.f32 %v1802, %v1803
    %v1805 = vsel %vm531, %v1797, 0.0
    %v1806 = vadd.f32 %v1804, %v1805
    %1807 = vadd.xlane.f32.xlu0 %v1806
    %v1808 = vpop.xlane.xlu0 %1807
    %v1809 = vmul.f32 %v1808, 0.00390625
    %v1810 = vadd.f32 %v1702, %v1778
    %v1811 = vadd.f32 %v1703, %v1779
    %v1812 = vadd.f32 %v1704, %v1780
    %v1813 = vadd.f32 %v1705, %v1781
    %v1814 = vadd.f32 %v1809, 1e-05
    %v1815 = vrsqrt.pop %v1814
    %v1816 = vmul.f32 %v1815, %v1739
    %v1817 = vmul.f32 %v1815, %v1743
    %v1818 = vmul.f32 %v1815, %v1747
    %v1819 = vmul.f32 %v1815, %v1751
    %v1820 = vadd.f32 %v1712, %v1816
    %v1821 = vadd.f32 %v1713, %v1817
    %v1822 = vadd.f32 %v1714, %v1818
    %v1823 = vadd.f32 %v1715, %v1819
    %v1828 = vcombine.low %v1810, %v1811
    %v1829 = vcombine.low %v1812, %v1813
    %v1832 = vsub.f32 %v1604, %v1828
    %v1833 = vsub.f32 %v1605, %v1829
    %v1838 = vcombine.low %v1820, %v1821
    %v1839 = vcombine.low %v1822, %v1823
    %v1842 = vmul.f32 %v1832, %v1838
    %v1843 = vmul.f32 %v1833, %v1839
    %v1844 = vadd.f32 %v1597, 1.0
    %v1845 = vadd.f32 %v1599, 1.0
    %v1846 = vadd.f32 %v1601, 1.0
    %v1847 = vadd.f32 %v1603, 1.0
    %v1852 = vcombine.low %v1844, %v1845
    %v1853 = vcombine.low %v1846, %v1847
    %v1856 = vmul.f32 %v1842, %v1852
    %v1857 = vmul.f32 %v1843, %v1853
    %v1862 = vcombine.high %v1492, %v1494
    %v1863 = vcombine.high %v1574, %v1576
    %v1866 = vadd.f32 %v1856, %v1862
    %v1867 = vadd.f32 %v1857, %v1863
    %1868 = vst [vmem:[#allocation9] sm:$0xff] %v1866
    %1869 = vst [vmem:[#allocation9 + $0x8] sm:$0xff] %v1867
    // Predicated region
    $region46: #{tpu_custom_call.1} parent=1 // pred_check
      _
    $region47: #{tpu_custom_call.1} parent=1 // pred_check_branch
      %1871 = sbr.rel (0) target = $region49
    $region48: #{tpu_custom_call.1} parent=1 // pred_region
      %s1873 = ssub.s32 256, 256
      %1874 = vsyncadd [#allocation5], %s1873
      %s1876 = sshll.u32 [#allocation9], 4
      %s1877 = int_to_ptr.vmem [resolvable:$true] %s1876
      %1879 = dma.vmem_to_hbm [thread:$0]  %s1877, 256, %s8, [#allocation5]
    $region49: #{tpu_custom_call.1} parent=1 // pred_fallthru
      _
    // Predicated region
    $region50: #{tpu_custom_call.1} parent=1 // pred_check
      _
    $region51: #{tpu_custom_call.1} parent=1 // pred_check_branch
      %1881 = sbr.rel (0) target = $region53
    $region52: #{tpu_custom_call.1} parent=1 // pred_region
      %1882 = dma.done [#allocation5], 256
    $region53: #{tpu_custom_call.1} parent=1 // pred_fallthru
      _
    %1883 = vsyncpa [#allocation4], 1
    %1884 = vsyncpa [#allocation7], 1
    %1885 = vsyncpa [#allocation5], 1

</llo_original>
